<compile_context>
chip_gen: v7x
topology: tpu7x:2x2x1
jax: 0.10.0
libtpu: 0.0.40
codegen_flags: <defaults>
</compile_context>

<pallas_src>
import functools

import jax
import jax.numpy as jnp
from jax.experimental import pallas as pl
from jax.experimental.pallas import tpu as pltpu

LEAKY_SLOPE = 0.2
BN_EPS = 1e-5

# Set to jnp.bfloat16 on v6e / v7x to halve MXU input traffic; accumulation
# stays in f32 via preferred_element_type.  f32 keeps the strictest numerics.
MATMUL_DTYPE = jnp.float32

_COMPILER_PARAMS = pltpu.CompilerParams(
    dimension_semantics=("parallel",),
    vmem_limit_bytes=32 * 1024 * 1024,
)

# TODO(synk): for realistic Hi-Net volumes (64^3+), add D/H spatial tiling with
# halo (grid=(B, D_tiles)) so tiles fit v7x's 64 MiB VMEM and both TensorCores
# get work; at the test shapes a whole volume per batch element fits easily.


# --------------------------- in-kernel helpers ------------------------------
def _build_im2col(xpad_ref, col_ref, D, H, W, C):
    """Scatter the 27 (kd,kh,kw) shifted taps of the zero-padded slab into the
    (D*H*W, 27*C) im2col scratch so the conv becomes one wide-K MXU matmul."""
    t = 0
    for kd in range(3):
        for kh in range(3):
            for kw in range(3):
                tap = xpad_ref[kd:kd + D, kh:kh + H, kw:kw + W, :]
                col_ref[:, t * C:(t + 1) * C] = tap.reshape(D * H * W, C)
                t += 1


def _store_stats(st_ref, y):
    # Per-batch partial sum / sum-of-squares for training-mode BatchNorm.
    st_ref[0, 0:1, :] = jnp.sum(y, axis=0, keepdims=True)
    st_ref[0, 1:2, :] = jnp.sum(y * y, axis=0, keepdims=True)


# ------------------ kernel 1: fusion + layer1 conv + stats ------------------
def _layer1_kernel(x1_ref, x2_ref, w_ref, o_ref, st_ref, xpad_ref, col_ref,
                   *, D, H, W, C):
    # x1_ref, x2_ref: (1, D, H, W, C)   w_ref: (27*3C, C)
    # o_ref: (1, D*H*W, C) pre-BN conv output   st_ref: (1, 2, C) BN partials
    a = x1_ref[0]
    b = x2_ref[0]
    # Zero-padded fused slab built directly in VMEM (halo stays zero, matching
    # Conv3d padding=1).  Channel order [sum | mul | max] matches torch.cat.
    xpad_ref[...] = jnp.zeros_like(xpad_ref)
    xpad_ref[1:D + 1, 1:H + 1, 1:W + 1, 0:C] = a + b
    xpad_ref[1:D + 1, 1:H + 1, 1:W + 1, C:2 * C] = a * b
    xpad_ref[1:D + 1, 1:H + 1, 1:W + 1, 2 * C:3 * C] = jnp.maximum(a, b)

    _build_im2col(xpad_ref, col_ref, D, H, W, 3 * C)
    y = jnp.dot(col_ref[...].astype(MATMUL_DTYPE),
                w_ref[...].astype(MATMUL_DTYPE),
                preferred_element_type=jnp.float32)          # (D*H*W, C)
    _store_stats(st_ref, y)
    o_ref[0] = y


# ------- kernel 2: BN1 affine + act prologue + layer2 conv + stats ----------
def _layer2_kernel(y_ref, sc_ref, sh_ref, w_ref, o_ref, st_ref, xpad_ref,
                   col_ref, *, D, H, W, Cin):
    # y_ref: (1, D*H*W, Cin) pre-BN layer1 conv output
    # sc_ref, sh_ref: (1, Cin) BN1 scale/shift    w_ref: (27*Cin, Cout)
    y = y_ref[0].reshape(D, H, W, Cin)
    z = y * sc_ref[...] + sh_ref[...]                 # BN1 affine (batch stats)
    act = jnp.where(z > 0, z, LEAKY_SLOPE * z)        # LeakyReLU(0.2)

    xpad_ref[...] = jnp.zeros_like(xpad_ref)
    xpad_ref[1:D + 1, 1:H + 1, 1:W + 1, :] = act      # zero halo == conv pad

    _build_im2col(xpad_ref, col_ref, D, H, W, Cin)
    y2 = jnp.dot(col_ref[...].astype(MATMUL_DTYPE),
                 w_ref[...].astype(MATMUL_DTYPE),
                 preferred_element_type=jnp.float32)         # (D*H*W, Cout)
    _store_stats(st_ref, y2)
    o_ref[0] = y2


# ------------- kernel 3: lane-dense BN2 affine + act epilogue ---------------
def _bn_act_kernel(y_ref, sc_ref, sh_ref, o_ref):
    # Blocks are (1, D, H*W*C): the lane dim is a large multiple of 128, and
    # scale/shift were pre-tiled to H*W*C in the wrapper (no in-kernel reshape).
    z = y_ref[...] * sc_ref[...] + sh_ref[...]
    o_ref[...] = jnp.where(z > 0, z, LEAKY_SLOPE * z)


# ------------------------------ pallas wrappers -----------------------------
def _fused_layer1(x1c, x2c, w1r):
    B, D, H, W, C = x1c.shape
    DHW = D * H * W
    kern = functools.partial(_layer1_kernel, D=D, H=H, W=W, C=C)
    return pl.pallas_call(
        kern,
        grid=(B,),
        out_shape=(jax.ShapeDtypeStruct((B, DHW, C), jnp.float32),
                   jax.ShapeDtypeStruct((B, 2, C), jnp.float32)),
        in_specs=[
            pl.BlockSpec((1, D, H, W, C), lambda b: (b, 0, 0, 0, 0)),
            pl.BlockSpec((1, D, H, W, C), lambda b: (b, 0, 0, 0, 0)),
            pl.BlockSpec((27 * 3 * C, C), lambda b: (0, 0)),
        ],
        out_specs=(
            pl.BlockSpec((1, DHW, C), lambda b: (b, 0, 0)),
            pl.BlockSpec((1, 2, C), lambda b: (b, 0, 0)),
        ),
        scratch_shapes=[
            pltpu.VMEM((D + 2, H + 2, W + 2, 3 * C), jnp.float32),  # padded slab
            pltpu.VMEM((DHW, 27 * 3 * C), jnp.float32),             # im2col
        ],
        compiler_params=_COMPILER_PARAMS,
    )(x1c, x2c, w1r)


def _fused_layer2(y1, scale1, shift1, w2r, D, H, W):
    B, DHW, Cin = y1.shape
    Cout = w2r.shape[-1]
    kern = functools.partial(_layer2_kernel, D=D, H=H, W=W, Cin=Cin)
    return pl.pallas_call(
        kern,
        grid=(B,),
        out_shape=(jax.ShapeDtypeStruct((B, DHW, Cout), jnp.float32),
                   jax.ShapeDtypeStruct((B, 2, Cout), jnp.float32)),
        in_specs=[
            pl.BlockSpec((1, DHW, Cin), lambda b: (b, 0, 0)),
            pl.BlockSpec((1, Cin), lambda b: (0, 0)),
            pl.BlockSpec((1, Cin), lambda b: (0, 0)),
            pl.BlockSpec((27 * Cin, Cout), lambda b: (0, 0)),
        ],
        out_specs=(
            pl.BlockSpec((1, DHW, Cout), lambda b: (b, 0, 0)),
            pl.BlockSpec((1, 2, Cout), lambda b: (b, 0, 0)),
        ),
        scratch_shapes=[
            pltpu.VMEM((D + 2, H + 2, W + 2, Cin), jnp.float32),
            pltpu.VMEM((DHW, 27 * Cin), jnp.float32),
        ],
        compiler_params=_COMPILER_PARAMS,
    )(y1, scale1, shift1, w2r)


def _bn_act_epilogue(y_flat, scale_flat, shift_flat):
    B, D, F = y_flat.shape
    return pl.pallas_call(
        _bn_act_kernel,
        grid=(B,),
        out_shape=jax.ShapeDtypeStruct((B, D, F), jnp.float32),
        in_specs=[
            pl.BlockSpec((1, D, F), lambda b: (b, 0, 0)),
            pl.BlockSpec((1, F), lambda b: (0, 0)),
            pl.BlockSpec((1, F), lambda b: (0, 0)),
        ],
        out_specs=pl.BlockSpec((1, D, F), lambda b: (b, 0, 0)),
        compiler_params=_COMPILER_PARAMS,
    )(y_flat, scale_flat, shift_flat)


def _bn_scale_shift(stats, gamma, beta, count):
    # stats: (B, 2, C) per-batch partial [sum, sum_sq]; finalize training-mode
    # BN scale/shift (biased variance, eps=1e-5).  Tiny per-channel math.
    total = jnp.sum(stats, axis=0)                     # (2, C)
    mean = total[0] / count
    var = jnp.maximum(total[1] / count - mean * mean, 0.0)
    scale = gamma * jax.lax.rsqrt(var + BN_EPS)
    shift = beta - mean * scale
    return scale, shift


# ------------------------------ module wrapper ------------------------------
def init_params(key, in_dim, out_dim):
    k1, k2, k3, k4 = jax.random.split(key, 4)
    return {
        "w1": jax.random.normal(k1, (3, 3, 3, 3 * in_dim, in_dim), jnp.float32) * 0.1,
        "b1": jax.random.normal(k2, (in_dim,), jnp.float32) * 0.1,   # cancelled by BN
        "g1": jnp.ones((in_dim,), jnp.float32),
        "beta1": jnp.zeros((in_dim,), jnp.float32),
        "w2": jax.random.normal(k3, (3, 3, 3, in_dim, out_dim), jnp.float32) * 0.1,
        "b2": jax.random.normal(k4, (out_dim,), jnp.float32) * 0.1,  # cancelled by BN
        "g2": jnp.ones((out_dim,), jnp.float32),
        "beta2": jnp.zeros((out_dim,), jnp.float32),
    }


@jax.jit
def mixed_fusion_block0(params, x1, x2):
    # x1, x2: NCDHW [B, C, D, H, W] (PyTorch convention); output NCDHW.
    B, C, D, H, W = x1.shape
    Cout = params["w2"].shape[-1]
    x1c = jnp.transpose(x1, (0, 2, 3, 4, 1))           # -> NDHWC
    x2c = jnp.transpose(x2, (0, 2, 3, 4, 1))
    w1r = params["w1"].reshape(27 * 3 * C, C)          # rows: (kd,kh,kw,cin)
    w2r = params["w2"].reshape(27 * C, Cout)
    n = B * D * H * W

    # layer1: fusion + conv, BN1 stats as side output.
    y1, st1 = _fused_layer1(x1c, x2c, w1r)
    scale1, shift1 = _bn_scale_shift(st1, params["g1"], params["beta1"], n)

    # layer2: BN1 affine + act prologue + conv, BN2 stats as side output.
    y2, st2 = _fused_layer2(y1, scale1.reshape(1, C), shift1.reshape(1, C),
                            w2r, D, H, W)
    scale2, shift2 = _bn_scale_shift(st2, params["g2"], params["beta2"], n)

    # final BN2 affine + act, lane-dense on the (free) flattened view.
    y2f = y2.reshape(B, D, H * W * Cout)
    sc2 = jnp.tile(scale2, H * W).reshape(1, H * W * Cout)
    sh2 = jnp.tile(shift2, H * W).reshape(1, H * W * Cout)
    outf = _bn_act_epilogue(y2f, sc2, sh2)

    out = outf.reshape(B, D, H, W, Cout)
    return jnp.transpose(out, (0, 4, 1, 2, 3))         # -> NCDHW


# ------------------------------ pure-JAX reference --------------------------
def _ref_forward(params, x1, x2):
    x1c = jnp.transpose(x1, (0, 2, 3, 4, 1))
    x2c = jnp.transpose(x2, (0, 2, 3, 4, 1))
    fused = jnp.concatenate(
        [x1c + x2c, x1c * x2c, jnp.maximum(x1c, x2c)], axis=-1)

    def conv_bn_act(x, w, b, g, beta):
        y = jax.lax.conv_general_dilated(
            x, w, window_strides=(1, 1, 1), padding="SAME",
            dimension_numbers=("NDHWC", "DHWIO", "NDHWC")) + b
        mean = jnp.mean(y, axis=(0, 1, 2, 3))
        var = jnp.var(y, axis=(0, 1, 2, 3))
        z = (y - mean) * jax.lax.rsqrt(var + BN_EPS) * g + beta
        return jnp.where(z > 0, z, LEAKY_SLOPE * z)

    y1 = conv_bn_act(fused, params["w1"], params["b1"], params["g1"], params["beta1"])
    y2 = conv_bn_act(y1, params["w2"], params["b2"], params["g2"], params["beta2"])
    return jnp.transpose(y2, (0, 4, 1, 2, 3))


if __name__ == "__main__":
    key = jax.random.PRNGKey(0)
    kx1, kx2, kp = jax.random.split(key, 3)

    B, in_dim, out_dim = 2, 4, 8
    D, H, W = 8, 8, 8

    x1 = jax.random.normal(kx1, (B, in_dim, D, H, W), jnp.float32)   # NCDHW
    x2 = jax.random.normal(kx2, (B, in_dim, D, H, W), jnp.float32)
    params = init_params(kp, in_dim, out_dim)

    out = mixed_fusion_block0(params, x1, x2)
    out = jax.block_until_ready(out)
    assert out.shape == (B, out_dim, D, H, W), out.shape

    ref = _ref_forward(params, x1, x2)
    max_err = float(jnp.max(jnp.abs(out - ref)))
    if max_err > 5e-3:
        raise AssertionError(f"mismatch vs reference: max abs err = {max_err}")

    print("KERNEL_OK")
</pallas_src>

<mosaic_0001>
module attributes {stable_mosaic.version = 11 : i64} {
  func.func @_layer1_kernel(%arg0: i32, %arg1: memref<1x8x8x8x4xf32, #tpu.memory_space<vmem>>, %arg2: memref<1x8x8x8x4xf32, #tpu.memory_space<vmem>>, %arg3: memref<324x4xf32, #tpu.memory_space<vmem>>, %arg4: memref<1x512x4xf32, #tpu.memory_space<vmem>>, %arg5: memref<1x2x4xf32, #tpu.memory_space<vmem>>, %arg6: memref<10x10x10x12xf32, #tpu.memory_space<vmem>>, %arg7: memref<512x324xf32, #tpu.memory_space<vmem>>) attributes {dimension_semantics = [#tpu.dimension_semantics<parallel>], iteration_bounds = array<i64: 2>, scalar_prefetch = 0 : i64, scratch_operands = 2 : i64, tpu.core_type = #tpu.core_type<tc>, window_params = [{transform_indices = @transform_0, window_bounds = array<i64: 1, 8, 8, 8, 4>}, {transform_indices = @transform_1, window_bounds = array<i64: 1, 8, 8, 8, 4>}, {pipeline_mode = #tpu.pipeline_mode<synchronous>, transform_indices = @transform_2, window_bounds = array<i64: 324, 4>}, {transform_indices = @transform_3, window_bounds = array<i64: 1, 512, 4>}, {transform_indices = @transform_4, window_bounds = array<i64: 1, 2, 4>}]} {
    %c0 = arith.constant 0 : index
    %c0_0 = arith.constant 0 : index
    %c0_1 = arith.constant 0 : index
    %c0_2 = arith.constant 0 : index
    %c0_3 = arith.constant 0 : index
    %0 = vector.load %arg1[%c0, %c0_0, %c0_1, %c0_2, %c0_3] : memref<1x8x8x8x4xf32, #tpu.memory_space<vmem>>, vector<1x8x8x8x4xf32>
    %1 = vector.shape_cast %0 : vector<1x8x8x8x4xf32> to vector<8x8x8x4xf32>
    %c0_4 = arith.constant 0 : index
    %c0_5 = arith.constant 0 : index
    %c0_6 = arith.constant 0 : index
    %c0_7 = arith.constant 0 : index
    %c0_8 = arith.constant 0 : index
    %2 = vector.load %arg2[%c0_4, %c0_5, %c0_6, %c0_7, %c0_8] : memref<1x8x8x8x4xf32, #tpu.memory_space<vmem>>, vector<1x8x8x8x4xf32>
    %3 = vector.shape_cast %2 : vector<1x8x8x8x4xf32> to vector<8x8x8x4xf32>
    %cst = arith.constant 0.000000e+00 : f32
    %4 = vector.broadcast %cst : f32 to vector<10x10x10x12xf32>
    %c0_9 = arith.constant 0 : index
    %c0_10 = arith.constant 0 : index
    %c0_11 = arith.constant 0 : index
    %c0_12 = arith.constant 0 : index
    %5 = vector.load %arg6[%c0_9, %c0_10, %c0_11, %c0_12] : memref<10x10x10x12xf32, #tpu.memory_space<vmem>>, vector<10x10x10x12xf32>
    tpu.vector_store %arg6[%c0_9, %c0_10, %c0_11, %c0_12], %4 {strides = array<i32>} : memref<10x10x10x12xf32, #tpu.memory_space<vmem>>, vector<10x10x10x12xf32>,
    %6 = arith.addf %1, %3 : vector<8x8x8x4xf32>
    %c1 = arith.constant 1 : index
    %c1_13 = arith.constant 1 : index
    %c1_14 = arith.constant 1 : index
    %c0_15 = arith.constant 0 : index
    %7 = vector.load %arg6[%c1, %c1_13, %c1_14, %c0_15] : memref<10x10x10x12xf32, #tpu.memory_space<vmem>>, vector<8x8x8x4xf32>
    tpu.vector_store %arg6[%c1, %c1_13, %c1_14, %c0_15], %6 {strides = array<i32>} : memref<10x10x10x12xf32, #tpu.memory_space<vmem>>, vector<8x8x8x4xf32>,
    %8 = arith.mulf %1, %3 : vector<8x8x8x4xf32>
    %c1_16 = arith.constant 1 : index
    %c1_17 = arith.constant 1 : index
    %c1_18 = arith.constant 1 : index
    %c4 = arith.constant 4 : index
    %9 = vector.load %arg6[%c1_16, %c1_17, %c1_18, %c4] : memref<10x10x10x12xf32, #tpu.memory_space<vmem>>, vector<8x8x8x4xf32>
    tpu.vector_store %arg6[%c1_16, %c1_17, %c1_18, %c4], %8 {strides = array<i32>} : memref<10x10x10x12xf32, #tpu.memory_space<vmem>>, vector<8x8x8x4xf32>,
    %10 = arith.maximumf %1, %3 : vector<8x8x8x4xf32>
    %c1_19 = arith.constant 1 : index
    %c1_20 = arith.constant 1 : index
    %c1_21 = arith.constant 1 : index
    %c8 = arith.constant 8 : index
    %11 = vector.load %arg6[%c1_19, %c1_20, %c1_21, %c8] : memref<10x10x10x12xf32, #tpu.memory_space<vmem>>, vector<8x8x8x4xf32>
    tpu.vector_store %arg6[%c1_19, %c1_20, %c1_21, %c8], %10 {strides = array<i32>} : memref<10x10x10x12xf32, #tpu.memory_space<vmem>>, vector<8x8x8x4xf32>,
    %c0_22 = arith.constant 0 : index
    %c0_23 = arith.constant 0 : index
    %c0_24 = arith.constant 0 : index
    %c0_25 = arith.constant 0 : index
    %12 = vector.load %arg6[%c0_22, %c0_23, %c0_24, %c0_25] : memref<10x10x10x12xf32, #tpu.memory_space<vmem>>, vector<8x8x8x12xf32>
    %13 = vector.shape_cast %12 : vector<8x8x8x12xf32> to vector<512x12xf32>
    %c0_26 = arith.constant 0 : index
    %c0_27 = arith.constant 0 : index
    %14 = vector.load %arg7[%c0_26, %c0_27] : memref<512x324xf32, #tpu.memory_space<vmem>>, vector<512x12xf32>
    tpu.vector_store %arg7[%c0_26, %c0_27], %13 {strides = array<i32>} : memref<512x324xf32, #tpu.memory_space<vmem>>, vector<512x12xf32>,
    %c0_28 = arith.constant 0 : index
    %c0_29 = arith.constant 0 : index
    %c1_30 = arith.constant 1 : index
    %c0_31 = arith.constant 0 : index
    %15 = vector.load %arg6[%c0_28, %c0_29, %c1_30, %c0_31] : memref<10x10x10x12xf32, #tpu.memory_space<vmem>>, vector<8x8x8x12xf32>
    %16 = vector.shape_cast %15 : vector<8x8x8x12xf32> to vector<512x12xf32>
    %c0_32 = arith.constant 0 : index
    %c12 = arith.constant 12 : index
    %17 = vector.load %arg7[%c0_32, %c12] : memref<512x324xf32, #tpu.memory_space<vmem>>, vector<512x12xf32>
    tpu.vector_store %arg7[%c0_32, %c12], %16 {strides = array<i32>} : memref<512x324xf32, #tpu.memory_space<vmem>>, vector<512x12xf32>,
    %c0_33 = arith.constant 0 : index
    %c0_34 = arith.constant 0 : index
    %c2 = arith.constant 2 : index
    %c0_35 = arith.constant 0 : index
    %18 = vector.load %arg6[%c0_33, %c0_34, %c2, %c0_35] : memref<10x10x10x12xf32, #tpu.memory_space<vmem>>, vector<8x8x8x12xf32>
    %19 = vector.shape_cast %18 : vector<8x8x8x12xf32> to vector<512x12xf32>
    %c0_36 = arith.constant 0 : index
    %c24 = arith.constant 24 : index
    %20 = vector.load %arg7[%c0_36, %c24] : memref<512x324xf32, #tpu.memory_space<vmem>>, vector<512x12xf32>
    tpu.vector_store %arg7[%c0_36, %c24], %19 {strides = array<i32>} : memref<512x324xf32, #tpu.memory_space<vmem>>, vector<512x12xf32>,
    %c0_37 = arith.constant 0 : index
    %c1_38 = arith.constant 1 : index
    %c0_39 = arith.constant 0 : index
    %c0_40 = arith.constant 0 : index
    %21 = vector.load %arg6[%c0_37, %c1_38, %c0_39, %c0_40] : memref<10x10x10x12xf32, #tpu.memory_space<vmem>>, vector<8x8x8x12xf32>
    %22 = vector.shape_cast %21 : vector<8x8x8x12xf32> to vector<512x12xf32>
    %c0_41 = arith.constant 0 : index
    %c36 = arith.constant 36 : index
    %23 = vector.load %arg7[%c0_41, %c36] : memref<512x324xf32, #tpu.memory_space<vmem>>, vector<512x12xf32>
    tpu.vector_store %arg7[%c0_41, %c36], %22 {strides = array<i32>} : memref<512x324xf32, #tpu.memory_space<vmem>>, vector<512x12xf32>,
    %c0_42 = arith.constant 0 : index
    %c1_43 = arith.constant 1 : index
    %c1_44 = arith.constant 1 : index
    %c0_45 = arith.constant 0 : index
    %24 = vector.load %arg6[%c0_42, %c1_43, %c1_44, %c0_45] : memref<10x10x10x12xf32, #tpu.memory_space<vmem>>, vector<8x8x8x12xf32>
    %25 = vector.shape_cast %24 : vector<8x8x8x12xf32> to vector<512x12xf32>
    %c0_46 = arith.constant 0 : index
    %c48 = arith.constant 48 : index
    %26 = vector.load %arg7[%c0_46, %c48] : memref<512x324xf32, #tpu.memory_space<vmem>>, vector<512x12xf32>
    tpu.vector_store %arg7[%c0_46, %c48], %25 {strides = array<i32>} : memref<512x324xf32, #tpu.memory_space<vmem>>, vector<512x12xf32>,
    %c0_47 = arith.constant 0 : index
    %c1_48 = arith.constant 1 : index
    %c2_49 = arith.constant 2 : index
    %c0_50 = arith.constant 0 : index
    %27 = vector.load %arg6[%c0_47, %c1_48, %c2_49, %c0_50] : memref<10x10x10x12xf32, #tpu.memory_space<vmem>>, vector<8x8x8x12xf32>
    %28 = vector.shape_cast %27 : vector<8x8x8x12xf32> to vector<512x12xf32>
    %c0_51 = arith.constant 0 : index
    %c60 = arith.constant 60 : index
    %29 = vector.load %arg7[%c0_51, %c60] : memref<512x324xf32, #tpu.memory_space<vmem>>, vector<512x12xf32>
    tpu.vector_store %arg7[%c0_51, %c60], %28 {strides = array<i32>} : memref<512x324xf32, #tpu.memory_space<vmem>>, vector<512x12xf32>,
    %c0_52 = arith.constant 0 : index
    %c2_53 = arith.constant 2 : index
    %c0_54 = arith.constant 0 : index
    %c0_55 = arith.constant 0 : index
    %30 = vector.load %arg6[%c0_52, %c2_53, %c0_54, %c0_55] : memref<10x10x10x12xf32, #tpu.memory_space<vmem>>, vector<8x8x8x12xf32>
    %31 = vector.shape_cast %30 : vector<8x8x8x12xf32> to vector<512x12xf32>
    %c0_56 = arith.constant 0 : index
    %c72 = arith.constant 72 : index
    %32 = vector.load %arg7[%c0_56, %c72] : memref<512x324xf32, #tpu.memory_space<vmem>>, vector<512x12xf32>
    tpu.vector_store %arg7[%c0_56, %c72], %31 {strides = array<i32>} : memref<512x324xf32, #tpu.memory_space<vmem>>, vector<512x12xf32>,
    %c0_57 = arith.constant 0 : index
    %c2_58 = arith.constant 2 : index
    %c1_59 = arith.constant 1 : index
    %c0_60 = arith.constant 0 : index
    %33 = vector.load %arg6[%c0_57, %c2_58, %c1_59, %c0_60] : memref<10x10x10x12xf32, #tpu.memory_space<vmem>>, vector<8x8x8x12xf32>
    %34 = vector.shape_cast %33 : vector<8x8x8x12xf32> to vector<512x12xf32>
    %c0_61 = arith.constant 0 : index
    %c84 = arith.constant 84 : index
    %35 = vector.load %arg7[%c0_61, %c84] : memref<512x324xf32, #tpu.memory_space<vmem>>, vector<512x12xf32>
    tpu.vector_store %arg7[%c0_61, %c84], %34 {strides = array<i32>} : memref<512x324xf32, #tpu.memory_space<vmem>>, vector<512x12xf32>,
    %c0_62 = arith.constant 0 : index
    %c2_63 = arith.constant 2 : index
    %c2_64 = arith.constant 2 : index
    %c0_65 = arith.constant 0 : index
    %36 = vector.load %arg6[%c0_62, %c2_63, %c2_64, %c0_65] : memref<10x10x10x12xf32, #tpu.memory_space<vmem>>, vector<8x8x8x12xf32>
    %37 = vector.shape_cast %36 : vector<8x8x8x12xf32> to vector<512x12xf32>
    %c0_66 = arith.constant 0 : index
    %c96 = arith.constant 96 : index
    %38 = vector.load %arg7[%c0_66, %c96] : memref<512x324xf32, #tpu.memory_space<vmem>>, vector<512x12xf32>
    tpu.vector_store %arg7[%c0_66, %c96], %37 {strides = array<i32>} : memref<512x324xf32, #tpu.memory_space<vmem>>, vector<512x12xf32>,
    %c1_67 = arith.constant 1 : index
    %c0_68 = arith.constant 0 : index
    %c0_69 = arith.constant 0 : index
    %c0_70 = arith.constant 0 : index
    %39 = vector.load %arg6[%c1_67, %c0_68, %c0_69, %c0_70] : memref<10x10x10x12xf32, #tpu.memory_space<vmem>>, vector<8x8x8x12xf32>
    %40 = vector.shape_cast %39 : vector<8x8x8x12xf32> to vector<512x12xf32>
    %c0_71 = arith.constant 0 : index
    %c108 = arith.constant 108 : index
    %41 = vector.load %arg7[%c0_71, %c108] : memref<512x324xf32, #tpu.memory_space<vmem>>, vector<512x12xf32>
    tpu.vector_store %arg7[%c0_71, %c108], %40 {strides = array<i32>} : memref<512x324xf32, #tpu.memory_space<vmem>>, vector<512x12xf32>,
    %c1_72 = arith.constant 1 : index
    %c0_73 = arith.constant 0 : index
    %c1_74 = arith.constant 1 : index
    %c0_75 = arith.constant 0 : index
    %42 = vector.load %arg6[%c1_72, %c0_73, %c1_74, %c0_75] : memref<10x10x10x12xf32, #tpu.memory_space<vmem>>, vector<8x8x8x12xf32>
    %43 = vector.shape_cast %42 : vector<8x8x8x12xf32> to vector<512x12xf32>
    %c0_76 = arith.constant 0 : index
    %c120 = arith.constant 120 : index
    %44 = vector.load %arg7[%c0_76, %c120] : memref<512x324xf32, #tpu.memory_space<vmem>>, vector<512x12xf32>
    tpu.vector_store %arg7[%c0_76, %c120], %43 {strides = array<i32>} : memref<512x324xf32, #tpu.memory_space<vmem>>, vector<512x12xf32>,
    %c1_77 = arith.constant 1 : index
    %c0_78 = arith.constant 0 : index
    %c2_79 = arith.constant 2 : index
    %c0_80 = arith.constant 0 : index
    %45 = vector.load %arg6[%c1_77, %c0_78, %c2_79, %c0_80] : memref<10x10x10x12xf32, #tpu.memory_space<vmem>>, vector<8x8x8x12xf32>
    %46 = vector.shape_cast %45 : vector<8x8x8x12xf32> to vector<512x12xf32>
    %c0_81 = arith.constant 0 : index
    %c132 = arith.constant 132 : index
    %47 = vector.load %arg7[%c0_81, %c132] : memref<512x324xf32, #tpu.memory_space<vmem>>, vector<512x12xf32>
    tpu.vector_store %arg7[%c0_81, %c132], %46 {strides = array<i32>} : memref<512x324xf32, #tpu.memory_space<vmem>>, vector<512x12xf32>,
    %c1_82 = arith.constant 1 : index
    %c1_83 = arith.constant 1 : index
    %c0_84 = arith.constant 0 : index
    %c0_85 = arith.constant 0 : index
    %48 = vector.load %arg6[%c1_82, %c1_83, %c0_84, %c0_85] : memref<10x10x10x12xf32, #tpu.memory_space<vmem>>, vector<8x8x8x12xf32>
    %49 = vector.shape_cast %48 : vector<8x8x8x12xf32> to vector<512x12xf32>
    %c0_86 = arith.constant 0 : index
    %c144 = arith.constant 144 : index
    %50 = vector.load %arg7[%c0_86, %c144] : memref<512x324xf32, #tpu.memory_space<vmem>>, vector<512x12xf32>
    tpu.vector_store %arg7[%c0_86, %c144], %49 {strides = array<i32>} : memref<512x324xf32, #tpu.memory_space<vmem>>, vector<512x12xf32>,
    %c1_87 = arith.constant 1 : index
    %c1_88 = arith.constant 1 : index
    %c1_89 = arith.constant 1 : index
    %c0_90 = arith.constant 0 : index
    %51 = vector.load %arg6[%c1_87, %c1_88, %c1_89, %c0_90] : memref<10x10x10x12xf32, #tpu.memory_space<vmem>>, vector<8x8x8x12xf32>
    %52 = vector.shape_cast %51 : vector<8x8x8x12xf32> to vector<512x12xf32>
    %c0_91 = arith.constant 0 : index
    %c156 = arith.constant 156 : index
    %53 = vector.load %arg7[%c0_91, %c156] : memref<512x324xf32, #tpu.memory_space<vmem>>, vector<512x12xf32>
    tpu.vector_store %arg7[%c0_91, %c156], %52 {strides = array<i32>} : memref<512x324xf32, #tpu.memory_space<vmem>>, vector<512x12xf32>,
    %c1_92 = arith.constant 1 : index
    %c1_93 = arith.constant 1 : index
    %c2_94 = arith.constant 2 : index
    %c0_95 = arith.constant 0 : index
    %54 = vector.load %arg6[%c1_92, %c1_93, %c2_94, %c0_95] : memref<10x10x10x12xf32, #tpu.memory_space<vmem>>, vector<8x8x8x12xf32>
    %55 = vector.shape_cast %54 : vector<8x8x8x12xf32> to vector<512x12xf32>
    %c0_96 = arith.constant 0 : index
    %c168 = arith.constant 168 : index
    %56 = vector.load %arg7[%c0_96, %c168] : memref<512x324xf32, #tpu.memory_space<vmem>>, vector<512x12xf32>
    tpu.vector_store %arg7[%c0_96, %c168], %55 {strides = array<i32>} : memref<512x324xf32, #tpu.memory_space<vmem>>, vector<512x12xf32>,
    %c1_97 = arith.constant 1 : index
    %c2_98 = arith.constant 2 : index
    %c0_99 = arith.constant 0 : index
    %c0_100 = arith.constant 0 : index
    %57 = vector.load %arg6[%c1_97, %c2_98, %c0_99, %c0_100] : memref<10x10x10x12xf32, #tpu.memory_space<vmem>>, vector<8x8x8x12xf32>
    %58 = vector.shape_cast %57 : vector<8x8x8x12xf32> to vector<512x12xf32>
    %c0_101 = arith.constant 0 : index
    %c180 = arith.constant 180 : index
    %59 = vector.load %arg7[%c0_101, %c180] : memref<512x324xf32, #tpu.memory_space<vmem>>, vector<512x12xf32>
    tpu.vector_store %arg7[%c0_101, %c180], %58 {strides = array<i32>} : memref<512x324xf32, #tpu.memory_space<vmem>>, vector<512x12xf32>,
    %c1_102 = arith.constant 1 : index
    %c2_103 = arith.constant 2 : index
    %c1_104 = arith.constant 1 : index
    %c0_105 = arith.constant 0 : index
    %60 = vector.load %arg6[%c1_102, %c2_103, %c1_104, %c0_105] : memref<10x10x10x12xf32, #tpu.memory_space<vmem>>, vector<8x8x8x12xf32>
    %61 = vector.shape_cast %60 : vector<8x8x8x12xf32> to vector<512x12xf32>
    %c0_106 = arith.constant 0 : index
    %c192 = arith.constant 192 : index
    %62 = vector.load %arg7[%c0_106, %c192] : memref<512x324xf32, #tpu.memory_space<vmem>>, vector<512x12xf32>
    tpu.vector_store %arg7[%c0_106, %c192], %61 {strides = array<i32>} : memref<512x324xf32, #tpu.memory_space<vmem>>, vector<512x12xf32>,
    %c1_107 = arith.constant 1 : index
    %c2_108 = arith.constant 2 : index
    %c2_109 = arith.constant 2 : index
    %c0_110 = arith.constant 0 : index
    %63 = vector.load %arg6[%c1_107, %c2_108, %c2_109, %c0_110] : memref<10x10x10x12xf32, #tpu.memory_space<vmem>>, vector<8x8x8x12xf32>
    %64 = vector.shape_cast %63 : vector<8x8x8x12xf32> to vector<512x12xf32>
    %c0_111 = arith.constant 0 : index
    %c204 = arith.constant 204 : index
    %65 = vector.load %arg7[%c0_111, %c204] : memref<512x324xf32, #tpu.memory_space<vmem>>, vector<512x12xf32>
    tpu.vector_store %arg7[%c0_111, %c204], %64 {strides = array<i32>} : memref<512x324xf32, #tpu.memory_space<vmem>>, vector<512x12xf32>,
    %c2_112 = arith.constant 2 : index
    %c0_113 = arith.constant 0 : index
    %c0_114 = arith.constant 0 : index
    %c0_115 = arith.constant 0 : index
    %66 = vector.load %arg6[%c2_112, %c0_113, %c0_114, %c0_115] : memref<10x10x10x12xf32, #tpu.memory_space<vmem>>, vector<8x8x8x12xf32>
    %67 = vector.shape_cast %66 : vector<8x8x8x12xf32> to vector<512x12xf32>
    %c0_116 = arith.constant 0 : index
    %c216 = arith.constant 216 : index
    %68 = vector.load %arg7[%c0_116, %c216] : memref<512x324xf32, #tpu.memory_space<vmem>>, vector<512x12xf32>
    tpu.vector_store %arg7[%c0_116, %c216], %67 {strides = array<i32>} : memref<512x324xf32, #tpu.memory_space<vmem>>, vector<512x12xf32>,
    %c2_117 = arith.constant 2 : index
    %c0_118 = arith.constant 0 : index
    %c1_119 = arith.constant 1 : index
    %c0_120 = arith.constant 0 : index
    %69 = vector.load %arg6[%c2_117, %c0_118, %c1_119, %c0_120] : memref<10x10x10x12xf32, #tpu.memory_space<vmem>>, vector<8x8x8x12xf32>
    %70 = vector.shape_cast %69 : vector<8x8x8x12xf32> to vector<512x12xf32>
    %c0_121 = arith.constant 0 : index
    %c228 = arith.constant 228 : index
    %71 = vector.load %arg7[%c0_121, %c228] : memref<512x324xf32, #tpu.memory_space<vmem>>, vector<512x12xf32>
    tpu.vector_store %arg7[%c0_121, %c228], %70 {strides = array<i32>} : memref<512x324xf32, #tpu.memory_space<vmem>>, vector<512x12xf32>,
    %c2_122 = arith.constant 2 : index
    %c0_123 = arith.constant 0 : index
    %c2_124 = arith.constant 2 : index
    %c0_125 = arith.constant 0 : index
    %72 = vector.load %arg6[%c2_122, %c0_123, %c2_124, %c0_125] : memref<10x10x10x12xf32, #tpu.memory_space<vmem>>, vector<8x8x8x12xf32>
    %73 = vector.shape_cast %72 : vector<8x8x8x12xf32> to vector<512x12xf32>
    %c0_126 = arith.constant 0 : index
    %c240 = arith.constant 240 : index
    %74 = vector.load %arg7[%c0_126, %c240] : memref<512x324xf32, #tpu.memory_space<vmem>>, vector<512x12xf32>
    tpu.vector_store %arg7[%c0_126, %c240], %73 {strides = array<i32>} : memref<512x324xf32, #tpu.memory_space<vmem>>, vector<512x12xf32>,
    %c2_127 = arith.constant 2 : index
    %c1_128 = arith.constant 1 : index
    %c0_129 = arith.constant 0 : index
    %c0_130 = arith.constant 0 : index
    %75 = vector.load %arg6[%c2_127, %c1_128, %c0_129, %c0_130] : memref<10x10x10x12xf32, #tpu.memory_space<vmem>>, vector<8x8x8x12xf32>
    %76 = vector.shape_cast %75 : vector<8x8x8x12xf32> to vector<512x12xf32>
    %c0_131 = arith.constant 0 : index
    %c252 = arith.constant 252 : index
    %77 = vector.load %arg7[%c0_131, %c252] : memref<512x324xf32, #tpu.memory_space<vmem>>, vector<512x12xf32>
    tpu.vector_store %arg7[%c0_131, %c252], %76 {strides = array<i32>} : memref<512x324xf32, #tpu.memory_space<vmem>>, vector<512x12xf32>,
    %c2_132 = arith.constant 2 : index
    %c1_133 = arith.constant 1 : index
    %c1_134 = arith.constant 1 : index
    %c0_135 = arith.constant 0 : index
    %78 = vector.load %arg6[%c2_132, %c1_133, %c1_134, %c0_135] : memref<10x10x10x12xf32, #tpu.memory_space<vmem>>, vector<8x8x8x12xf32>
    %79 = vector.shape_cast %78 : vector<8x8x8x12xf32> to vector<512x12xf32>
    %c0_136 = arith.constant 0 : index
    %c264 = arith.constant 264 : index
    %80 = vector.load %arg7[%c0_136, %c264] : memref<512x324xf32, #tpu.memory_space<vmem>>, vector<512x12xf32>
    tpu.vector_store %arg7[%c0_136, %c264], %79 {strides = array<i32>} : memref<512x324xf32, #tpu.memory_space<vmem>>, vector<512x12xf32>,
    %c2_137 = arith.constant 2 : index
    %c1_138 = arith.constant 1 : index
    %c2_139 = arith.constant 2 : index
    %c0_140 = arith.constant 0 : index
    %81 = vector.load %arg6[%c2_137, %c1_138, %c2_139, %c0_140] : memref<10x10x10x12xf32, #tpu.memory_space<vmem>>, vector<8x8x8x12xf32>
    %82 = vector.shape_cast %81 : vector<8x8x8x12xf32> to vector<512x12xf32>
    %c0_141 = arith.constant 0 : index
    %c276 = arith.constant 276 : index
    %83 = vector.load %arg7[%c0_141, %c276] : memref<512x324xf32, #tpu.memory_space<vmem>>, vector<512x12xf32>
    tpu.vector_store %arg7[%c0_141, %c276], %82 {strides = array<i32>} : memref<512x324xf32, #tpu.memory_space<vmem>>, vector<512x12xf32>,
    %c2_142 = arith.constant 2 : index
    %c2_143 = arith.constant 2 : index
    %c0_144 = arith.constant 0 : index
    %c0_145 = arith.constant 0 : index
    %84 = vector.load %arg6[%c2_142, %c2_143, %c0_144, %c0_145] : memref<10x10x10x12xf32, #tpu.memory_space<vmem>>, vector<8x8x8x12xf32>
    %85 = vector.shape_cast %84 : vector<8x8x8x12xf32> to vector<512x12xf32>
    %c0_146 = arith.constant 0 : index
    %c288 = arith.constant 288 : index
    %86 = vector.load %arg7[%c0_146, %c288] : memref<512x324xf32, #tpu.memory_space<vmem>>, vector<512x12xf32>
    tpu.vector_store %arg7[%c0_146, %c288], %85 {strides = array<i32>} : memref<512x324xf32, #tpu.memory_space<vmem>>, vector<512x12xf32>,
    %c2_147 = arith.constant 2 : index
    %c2_148 = arith.constant 2 : index
    %c1_149 = arith.constant 1 : index
    %c0_150 = arith.constant 0 : index
    %87 = vector.load %arg6[%c2_147, %c2_148, %c1_149, %c0_150] : memref<10x10x10x12xf32, #tpu.memory_space<vmem>>, vector<8x8x8x12xf32>
    %88 = vector.shape_cast %87 : vector<8x8x8x12xf32> to vector<512x12xf32>
    %c0_151 = arith.constant 0 : index
    %c300 = arith.constant 300 : index
    %89 = vector.load %arg7[%c0_151, %c300] : memref<512x324xf32, #tpu.memory_space<vmem>>, vector<512x12xf32>
    tpu.vector_store %arg7[%c0_151, %c300], %88 {strides = array<i32>} : memref<512x324xf32, #tpu.memory_space<vmem>>, vector<512x12xf32>,
    %c2_152 = arith.constant 2 : index
    %c2_153 = arith.constant 2 : index
    %c2_154 = arith.constant 2 : index
    %c0_155 = arith.constant 0 : index
    %90 = vector.load %arg6[%c2_152, %c2_153, %c2_154, %c0_155] : memref<10x10x10x12xf32, #tpu.memory_space<vmem>>, vector<8x8x8x12xf32>
    %91 = vector.shape_cast %90 : vector<8x8x8x12xf32> to vector<512x12xf32>
    %c0_156 = arith.constant 0 : index
    %c312 = arith.constant 312 : index
    %92 = vector.load %arg7[%c0_156, %c312] : memref<512x324xf32, #tpu.memory_space<vmem>>, vector<512x12xf32>
    tpu.vector_store %arg7[%c0_156, %c312], %91 {strides = array<i32>} : memref<512x324xf32, #tpu.memory_space<vmem>>, vector<512x12xf32>,
    %c0_157 = arith.constant 0 : index
    %c0_158 = arith.constant 0 : index
    %93 = vector.load %arg7[%c0_157, %c0_158] : memref<512x324xf32, #tpu.memory_space<vmem>>, vector<512x324xf32>
    %c0_159 = arith.constant 0 : index
    %c0_160 = arith.constant 0 : index
    %94 = vector.load %arg3[%c0_159, %c0_160] : memref<324x4xf32, #tpu.memory_space<vmem>>, vector<324x4xf32>
    %cst_161 = arith.constant dense<0.000000e+00> : vector<512x4xf32>
    %95 = tpu.matmul %93, %94, %cst_161 {dimension_numbers = #tpu.dot_dimension_numbers<[1], [0], [0], [1], [0, 0, 1, 1], [], []>} : vector<512x324xf32>, vector<324x4xf32>, vector<512x4xf32> -> vector<512x4xf32>
    %cst_162 = arith.constant dense<0.000000e+00> : vector<4xf32>
    %96 = vector.multi_reduction <add>, %95, %cst_162 [0] : vector<512x4xf32> to vector<4xf32>
    %97 = vector.shape_cast %96 : vector<4xf32> to vector<1x4xf32>
    %c0_163 = arith.constant 0 : index
    %c0_164 = arith.constant 0 : index
    %c0_165 = arith.constant 0 : index
    %98 = vector.load %arg5[%c0_163, %c0_164, %c0_165] : memref<1x2x4xf32, #tpu.memory_space<vmem>>, vector<1x1x4xf32>
    %99 = vector.shape_cast %98 : vector<1x1x4xf32> to vector<1x4xf32>
    %100 = vector.shape_cast %97 : vector<1x4xf32> to vector<1x1x4xf32>
    tpu.vector_store %arg5[%c0_163, %c0_164, %c0_165], %100 {strides = array<i32>} : memref<1x2x4xf32, #tpu.memory_space<vmem>>, vector<1x1x4xf32>,
    %101 = arith.mulf %95, %95 : vector<512x4xf32>
    %cst_166 = arith.constant dense<0.000000e+00> : vector<4xf32>
    %102 = vector.multi_reduction <add>, %101, %cst_166 [0] : vector<512x4xf32> to vector<4xf32>
    %103 = vector.shape_cast %102 : vector<4xf32> to vector<1x4xf32>
    %c0_167 = arith.constant 0 : index
    %c1_168 = arith.constant 1 : index
    %c0_169 = arith.constant 0 : index
    %104 = vector.load %arg5[%c0_167, %c1_168, %c0_169] : memref<1x2x4xf32, #tpu.memory_space<vmem>>, vector<1x1x4xf32>
    %105 = vector.shape_cast %104 : vector<1x1x4xf32> to vector<1x4xf32>
    %106 = vector.shape_cast %103 : vector<1x4xf32> to vector<1x1x4xf32>
    tpu.vector_store %arg5[%c0_167, %c1_168, %c0_169], %106 {strides = array<i32>} : memref<1x2x4xf32, #tpu.memory_space<vmem>>, vector<1x1x4xf32>,
    %c0_170 = arith.constant 0 : index
    %c0_171 = arith.constant 0 : index
    %c0_172 = arith.constant 0 : index
    %107 = vector.load %arg4[%c0_170, %c0_171, %c0_172] : memref<1x512x4xf32, #tpu.memory_space<vmem>>, vector<1x512x4xf32>
    %108 = vector.shape_cast %107 : vector<1x512x4xf32> to vector<512x4xf32>
    %109 = vector.shape_cast %95 : vector<512x4xf32> to vector<1x512x4xf32>
    tpu.vector_store %arg4[%c0_170, %c0_171, %c0_172], %109 {strides = array<i32>} : memref<1x512x4xf32, #tpu.memory_space<vmem>>, vector<1x512x4xf32>,
    return
  }
  func.func @transform_0(%arg0: i32) -> (i32, i32, i32, i32, i32) {
    %c0_i32 = arith.constant 0 : i32
    %c0_i32_0 = arith.constant 0 : i32
    %c0_i32_1 = arith.constant 0 : i32
    %c0_i32_2 = arith.constant 0 : i32
    %c0_i32_3 = arith.constant 0 : i32
    return %arg0, %c0_i32, %c0_i32_0, %c0_i32_1, %c0_i32_2 : i32, i32, i32, i32, i32
  }
  func.func @transform_1(%arg0: i32) -> (i32, i32, i32, i32, i32) {
    %c0_i32 = arith.constant 0 : i32
    %c0_i32_0 = arith.constant 0 : i32
    %c0_i32_1 = arith.constant 0 : i32
    %c0_i32_2 = arith.constant 0 : i32
    %c0_i32_3 = arith.constant 0 : i32
    return %arg0, %c0_i32, %c0_i32_0, %c0_i32_1, %c0_i32_2 : i32, i32, i32, i32, i32
  }
  func.func @transform_2(%arg0: i32) -> (i32, i32) {
    %c0_i32 = arith.constant 0 : i32
    %c0_i32_0 = arith.constant 0 : i32
    %c0_i32_1 = arith.constant 0 : i32
    return %c0_i32, %c0_i32_0 : i32, i32
  }
  func.func @transform_3(%arg0: i32) -> (i32, i32, i32) {
    %c0_i32 = arith.constant 0 : i32
    %c0_i32_0 = arith.constant 0 : i32
    %c0_i32_1 = arith.constant 0 : i32
    return %arg0, %c0_i32, %c0_i32_0 : i32, i32, i32
  }
  func.func @transform_4(%arg0: i32) -> (i32, i32, i32) {
    %c0_i32 = arith.constant 0 : i32
    %c0_i32_0 = arith.constant 0 : i32
    %c0_i32_1 = arith.constant 0 : i32
    return %arg0, %c0_i32, %c0_i32_0 : i32, i32, i32
  }
}

module attributes {stable_mosaic.version = 11 : i64} {
  func.func @_layer2_kernel(%arg0: i32, %arg1: memref<1x512x4xf32, #tpu.memory_space<vmem>>, %arg2: memref<1x4xf32, #tpu.memory_space<vmem>>, %arg3: memref<1x4xf32, #tpu.memory_space<vmem>>, %arg4: memref<108x8xf32, #tpu.memory_space<vmem>>, %arg5: memref<1x512x8xf32, #tpu.memory_space<vmem>>, %arg6: memref<1x2x8xf32, #tpu.memory_space<vmem>>, %arg7: memref<10x10x10x4xf32, #tpu.memory_space<vmem>>, %arg8: memref<512x108xf32, #tpu.memory_space<vmem>>) attributes {dimension_semantics = [#tpu.dimension_semantics<parallel>], iteration_bounds = array<i64: 2>, scalar_prefetch = 0 : i64, scratch_operands = 2 : i64, tpu.core_type = #tpu.core_type<tc>, window_params = [{transform_indices = @transform_0, window_bounds = array<i64: 1, 512, 4>}, {pipeline_mode = #tpu.pipeline_mode<synchronous>, transform_indices = @transform_1, window_bounds = array<i64: 1, 4>}, {pipeline_mode = #tpu.pipeline_mode<synchronous>, transform_indices = @transform_2, window_bounds = array<i64: 1, 4>}, {pipeline_mode = #tpu.pipeline_mode<synchronous>, transform_indices = @transform_3, window_bounds = array<i64: 108, 8>}, {transform_indices = @transform_4, window_bounds = array<i64: 1, 512, 8>}, {transform_indices = @transform_5, window_bounds = array<i64: 1, 2, 8>}]} {
    %c0 = arith.constant 0 : index
    %c0_0 = arith.constant 0 : index
    %c0_1 = arith.constant 0 : index
    %0 = vector.load %arg1[%c0, %c0_0, %c0_1] : memref<1x512x4xf32, #tpu.memory_space<vmem>>, vector<1x512x4xf32>
    %1 = vector.shape_cast %0 : vector<1x512x4xf32> to vector<512x4xf32>
    %2 = vector.shape_cast %1 : vector<512x4xf32> to vector<8x8x8x4xf32>
    %c0_2 = arith.constant 0 : index
    %c0_3 = arith.constant 0 : index
    %3 = vector.load %arg2[%c0_2, %c0_3] : memref<1x4xf32, #tpu.memory_space<vmem>>, vector<1x4xf32>
    %4 = vector.shape_cast %3 : vector<1x4xf32> to vector<1x1x1x4xf32>
    %5 = vector.broadcast %4 : vector<1x1x1x4xf32> to vector<8x8x8x4xf32>
    %6 = arith.mulf %2, %5 : vector<8x8x8x4xf32>
    %c0_4 = arith.constant 0 : index
    %c0_5 = arith.constant 0 : index
    %7 = vector.load %arg3[%c0_4, %c0_5] : memref<1x4xf32, #tpu.memory_space<vmem>>, vector<1x4xf32>
    %8 = vector.shape_cast %7 : vector<1x4xf32> to vector<1x1x1x4xf32>
    %9 = vector.broadcast %8 : vector<1x1x1x4xf32> to vector<8x8x8x4xf32>
    %10 = arith.addf %6, %9 : vector<8x8x8x4xf32>
    %cst = arith.constant 0.000000e+00 : f32
    %11 = vector.broadcast %cst : f32 to vector<8x8x8x4xf32>
    %12 = arith.cmpf ogt, %10, %11 : vector<8x8x8x4xf32>
    %cst_6 = arith.constant 2.000000e-01 : f32
    %13 = vector.broadcast %cst_6 : f32 to vector<8x8x8x4xf32>
    %14 = arith.mulf %13, %10 : vector<8x8x8x4xf32>
    %15 = arith.select %12, %10, %14 : vector<8x8x8x4xi1>, vector<8x8x8x4xf32>
    %cst_7 = arith.constant 0.000000e+00 : f32
    %16 = vector.broadcast %cst_7 : f32 to vector<10x10x10x4xf32>
    %c0_8 = arith.constant 0 : index
    %c0_9 = arith.constant 0 : index
    %c0_10 = arith.constant 0 : index
    %c0_11 = arith.constant 0 : index
    %17 = vector.load %arg7[%c0_8, %c0_9, %c0_10, %c0_11] : memref<10x10x10x4xf32, #tpu.memory_space<vmem>>, vector<10x10x10x4xf32>
    tpu.vector_store %arg7[%c0_8, %c0_9, %c0_10, %c0_11], %16 {strides = array<i32>} : memref<10x10x10x4xf32, #tpu.memory_space<vmem>>, vector<10x10x10x4xf32>,
    %c1 = arith.constant 1 : index
    %c1_12 = arith.constant 1 : index
    %c1_13 = arith.constant 1 : index
    %c0_14 = arith.constant 0 : index
    %18 = vector.load %arg7[%c1, %c1_12, %c1_13, %c0_14] : memref<10x10x10x4xf32, #tpu.memory_space<vmem>>, vector<8x8x8x4xf32>
    tpu.vector_store %arg7[%c1, %c1_12, %c1_13, %c0_14], %15 {strides = array<i32>} : memref<10x10x10x4xf32, #tpu.memory_space<vmem>>, vector<8x8x8x4xf32>,
    %c0_15 = arith.constant 0 : index
    %c0_16 = arith.constant 0 : index
    %c0_17 = arith.constant 0 : index
    %c0_18 = arith.constant 0 : index
    %19 = vector.load %arg7[%c0_15, %c0_16, %c0_17, %c0_18] : memref<10x10x10x4xf32, #tpu.memory_space<vmem>>, vector<8x8x8x4xf32>
    %20 = vector.shape_cast %19 : vector<8x8x8x4xf32> to vector<512x4xf32>
    %c0_19 = arith.constant 0 : index
    %c0_20 = arith.constant 0 : index
    %21 = vector.load %arg8[%c0_19, %c0_20] : memref<512x108xf32, #tpu.memory_space<vmem>>, vector<512x4xf32>
    tpu.vector_store %arg8[%c0_19, %c0_20], %20 {strides = array<i32>} : memref<512x108xf32, #tpu.memory_space<vmem>>, vector<512x4xf32>,
    %c0_21 = arith.constant 0 : index
    %c0_22 = arith.constant 0 : index
    %c1_23 = arith.constant 1 : index
    %c0_24 = arith.constant 0 : index
    %22 = vector.load %arg7[%c0_21, %c0_22, %c1_23, %c0_24] : memref<10x10x10x4xf32, #tpu.memory_space<vmem>>, vector<8x8x8x4xf32>
    %23 = vector.shape_cast %22 : vector<8x8x8x4xf32> to vector<512x4xf32>
    %c0_25 = arith.constant 0 : index
    %c4 = arith.constant 4 : index
    %24 = vector.load %arg8[%c0_25, %c4] : memref<512x108xf32, #tpu.memory_space<vmem>>, vector<512x4xf32>
    tpu.vector_store %arg8[%c0_25, %c4], %23 {strides = array<i32>} : memref<512x108xf32, #tpu.memory_space<vmem>>, vector<512x4xf32>,
    %c0_26 = arith.constant 0 : index
    %c0_27 = arith.constant 0 : index
    %c2 = arith.constant 2 : index
    %c0_28 = arith.constant 0 : index
    %25 = vector.load %arg7[%c0_26, %c0_27, %c2, %c0_28] : memref<10x10x10x4xf32, #tpu.memory_space<vmem>>, vector<8x8x8x4xf32>
    %26 = vector.shape_cast %25 : vector<8x8x8x4xf32> to vector<512x4xf32>
    %c0_29 = arith.constant 0 : index
    %c8 = arith.constant 8 : index
    %27 = vector.load %arg8[%c0_29, %c8] : memref<512x108xf32, #tpu.memory_space<vmem>>, vector<512x4xf32>
    tpu.vector_store %arg8[%c0_29, %c8], %26 {strides = array<i32>} : memref<512x108xf32, #tpu.memory_space<vmem>>, vector<512x4xf32>,
    %c0_30 = arith.constant 0 : index
    %c1_31 = arith.constant 1 : index
    %c0_32 = arith.constant 0 : index
    %c0_33 = arith.constant 0 : index
    %28 = vector.load %arg7[%c0_30, %c1_31, %c0_32, %c0_33] : memref<10x10x10x4xf32, #tpu.memory_space<vmem>>, vector<8x8x8x4xf32>
    %29 = vector.shape_cast %28 : vector<8x8x8x4xf32> to vector<512x4xf32>
    %c0_34 = arith.constant 0 : index
    %c12 = arith.constant 12 : index
    %30 = vector.load %arg8[%c0_34, %c12] : memref<512x108xf32, #tpu.memory_space<vmem>>, vector<512x4xf32>
    tpu.vector_store %arg8[%c0_34, %c12], %29 {strides = array<i32>} : memref<512x108xf32, #tpu.memory_space<vmem>>, vector<512x4xf32>,
    %c0_35 = arith.constant 0 : index
    %c1_36 = arith.constant 1 : index
    %c1_37 = arith.constant 1 : index
    %c0_38 = arith.constant 0 : index
    %31 = vector.load %arg7[%c0_35, %c1_36, %c1_37, %c0_38] : memref<10x10x10x4xf32, #tpu.memory_space<vmem>>, vector<8x8x8x4xf32>
    %32 = vector.shape_cast %31 : vector<8x8x8x4xf32> to vector<512x4xf32>
    %c0_39 = arith.constant 0 : index
    %c16 = arith.constant 16 : index
    %33 = vector.load %arg8[%c0_39, %c16] : memref<512x108xf32, #tpu.memory_space<vmem>>, vector<512x4xf32>
    tpu.vector_store %arg8[%c0_39, %c16], %32 {strides = array<i32>} : memref<512x108xf32, #tpu.memory_space<vmem>>, vector<512x4xf32>,
    %c0_40 = arith.constant 0 : index
    %c1_41 = arith.constant 1 : index
    %c2_42 = arith.constant 2 : index
    %c0_43 = arith.constant 0 : index
    %34 = vector.load %arg7[%c0_40, %c1_41, %c2_42, %c0_43] : memref<10x10x10x4xf32, #tpu.memory_space<vmem>>, vector<8x8x8x4xf32>
    %35 = vector.shape_cast %34 : vector<8x8x8x4xf32> to vector<512x4xf32>
    %c0_44 = arith.constant 0 : index
    %c20 = arith.constant 20 : index
    %36 = vector.load %arg8[%c0_44, %c20] : memref<512x108xf32, #tpu.memory_space<vmem>>, vector<512x4xf32>
    tpu.vector_store %arg8[%c0_44, %c20], %35 {strides = array<i32>} : memref<512x108xf32, #tpu.memory_space<vmem>>, vector<512x4xf32>,
    %c0_45 = arith.constant 0 : index
    %c2_46 = arith.constant 2 : index
    %c0_47 = arith.constant 0 : index
    %c0_48 = arith.constant 0 : index
    %37 = vector.load %arg7[%c0_45, %c2_46, %c0_47, %c0_48] : memref<10x10x10x4xf32, #tpu.memory_space<vmem>>, vector<8x8x8x4xf32>
    %38 = vector.shape_cast %37 : vector<8x8x8x4xf32> to vector<512x4xf32>
    %c0_49 = arith.constant 0 : index
    %c24 = arith.constant 24 : index
    %39 = vector.load %arg8[%c0_49, %c24] : memref<512x108xf32, #tpu.memory_space<vmem>>, vector<512x4xf32>
    tpu.vector_store %arg8[%c0_49, %c24], %38 {strides = array<i32>} : memref<512x108xf32, #tpu.memory_space<vmem>>, vector<512x4xf32>,
    %c0_50 = arith.constant 0 : index
    %c2_51 = arith.constant 2 : index
    %c1_52 = arith.constant 1 : index
    %c0_53 = arith.constant 0 : index
    %40 = vector.load %arg7[%c0_50, %c2_51, %c1_52, %c0_53] : memref<10x10x10x4xf32, #tpu.memory_space<vmem>>, vector<8x8x8x4xf32>
    %41 = vector.shape_cast %40 : vector<8x8x8x4xf32> to vector<512x4xf32>
    %c0_54 = arith.constant 0 : index
    %c28 = arith.constant 28 : index
    %42 = vector.load %arg8[%c0_54, %c28] : memref<512x108xf32, #tpu.memory_space<vmem>>, vector<512x4xf32>
    tpu.vector_store %arg8[%c0_54, %c28], %41 {strides = array<i32>} : memref<512x108xf32, #tpu.memory_space<vmem>>, vector<512x4xf32>,
    %c0_55 = arith.constant 0 : index
    %c2_56 = arith.constant 2 : index
    %c2_57 = arith.constant 2 : index
    %c0_58 = arith.constant 0 : index
    %43 = vector.load %arg7[%c0_55, %c2_56, %c2_57, %c0_58] : memref<10x10x10x4xf32, #tpu.memory_space<vmem>>, vector<8x8x8x4xf32>
    %44 = vector.shape_cast %43 : vector<8x8x8x4xf32> to vector<512x4xf32>
    %c0_59 = arith.constant 0 : index
    %c32 = arith.constant 32 : index
    %45 = vector.load %arg8[%c0_59, %c32] : memref<512x108xf32, #tpu.memory_space<vmem>>, vector<512x4xf32>
    tpu.vector_store %arg8[%c0_59, %c32], %44 {strides = array<i32>} : memref<512x108xf32, #tpu.memory_space<vmem>>, vector<512x4xf32>,
    %c1_60 = arith.constant 1 : index
    %c0_61 = arith.constant 0 : index
    %c0_62 = arith.constant 0 : index
    %c0_63 = arith.constant 0 : index
    %46 = vector.load %arg7[%c1_60, %c0_61, %c0_62, %c0_63] : memref<10x10x10x4xf32, #tpu.memory_space<vmem>>, vector<8x8x8x4xf32>
    %47 = vector.shape_cast %46 : vector<8x8x8x4xf32> to vector<512x4xf32>
    %c0_64 = arith.constant 0 : index
    %c36 = arith.constant 36 : index
    %48 = vector.load %arg8[%c0_64, %c36] : memref<512x108xf32, #tpu.memory_space<vmem>>, vector<512x4xf32>
    tpu.vector_store %arg8[%c0_64, %c36], %47 {strides = array<i32>} : memref<512x108xf32, #tpu.memory_space<vmem>>, vector<512x4xf32>,
    %c1_65 = arith.constant 1 : index
    %c0_66 = arith.constant 0 : index
    %c1_67 = arith.constant 1 : index
    %c0_68 = arith.constant 0 : index
    %49 = vector.load %arg7[%c1_65, %c0_66, %c1_67, %c0_68] : memref<10x10x10x4xf32, #tpu.memory_space<vmem>>, vector<8x8x8x4xf32>
    %50 = vector.shape_cast %49 : vector<8x8x8x4xf32> to vector<512x4xf32>
    %c0_69 = arith.constant 0 : index
    %c40 = arith.constant 40 : index
    %51 = vector.load %arg8[%c0_69, %c40] : memref<512x108xf32, #tpu.memory_space<vmem>>, vector<512x4xf32>
    tpu.vector_store %arg8[%c0_69, %c40], %50 {strides = array<i32>} : memref<512x108xf32, #tpu.memory_space<vmem>>, vector<512x4xf32>,
    %c1_70 = arith.constant 1 : index
    %c0_71 = arith.constant 0 : index
    %c2_72 = arith.constant 2 : index
    %c0_73 = arith.constant 0 : index
    %52 = vector.load %arg7[%c1_70, %c0_71, %c2_72, %c0_73] : memref<10x10x10x4xf32, #tpu.memory_space<vmem>>, vector<8x8x8x4xf32>
    %53 = vector.shape_cast %52 : vector<8x8x8x4xf32> to vector<512x4xf32>
    %c0_74 = arith.constant 0 : index
    %c44 = arith.constant 44 : index
    %54 = vector.load %arg8[%c0_74, %c44] : memref<512x108xf32, #tpu.memory_space<vmem>>, vector<512x4xf32>
    tpu.vector_store %arg8[%c0_74, %c44], %53 {strides = array<i32>} : memref<512x108xf32, #tpu.memory_space<vmem>>, vector<512x4xf32>,
    %c1_75 = arith.constant 1 : index
    %c1_76 = arith.constant 1 : index
    %c0_77 = arith.constant 0 : index
    %c0_78 = arith.constant 0 : index
    %55 = vector.load %arg7[%c1_75, %c1_76, %c0_77, %c0_78] : memref<10x10x10x4xf32, #tpu.memory_space<vmem>>, vector<8x8x8x4xf32>
    %56 = vector.shape_cast %55 : vector<8x8x8x4xf32> to vector<512x4xf32>
    %c0_79 = arith.constant 0 : index
    %c48 = arith.constant 48 : index
    %57 = vector.load %arg8[%c0_79, %c48] : memref<512x108xf32, #tpu.memory_space<vmem>>, vector<512x4xf32>
    tpu.vector_store %arg8[%c0_79, %c48], %56 {strides = array<i32>} : memref<512x108xf32, #tpu.memory_space<vmem>>, vector<512x4xf32>,
    %c1_80 = arith.constant 1 : index
    %c1_81 = arith.constant 1 : index
    %c1_82 = arith.constant 1 : index
    %c0_83 = arith.constant 0 : index
    %58 = vector.load %arg7[%c1_80, %c1_81, %c1_82, %c0_83] : memref<10x10x10x4xf32, #tpu.memory_space<vmem>>, vector<8x8x8x4xf32>
    %59 = vector.shape_cast %58 : vector<8x8x8x4xf32> to vector<512x4xf32>
    %c0_84 = arith.constant 0 : index
    %c52 = arith.constant 52 : index
    %60 = vector.load %arg8[%c0_84, %c52] : memref<512x108xf32, #tpu.memory_space<vmem>>, vector<512x4xf32>
    tpu.vector_store %arg8[%c0_84, %c52], %59 {strides = array<i32>} : memref<512x108xf32, #tpu.memory_space<vmem>>, vector<512x4xf32>,
    %c1_85 = arith.constant 1 : index
    %c1_86 = arith.constant 1 : index
    %c2_87 = arith.constant 2 : index
    %c0_88 = arith.constant 0 : index
    %61 = vector.load %arg7[%c1_85, %c1_86, %c2_87, %c0_88] : memref<10x10x10x4xf32, #tpu.memory_space<vmem>>, vector<8x8x8x4xf32>
    %62 = vector.shape_cast %61 : vector<8x8x8x4xf32> to vector<512x4xf32>
    %c0_89 = arith.constant 0 : index
    %c56 = arith.constant 56 : index
    %63 = vector.load %arg8[%c0_89, %c56] : memref<512x108xf32, #tpu.memory_space<vmem>>, vector<512x4xf32>
    tpu.vector_store %arg8[%c0_89, %c56], %62 {strides = array<i32>} : memref<512x108xf32, #tpu.memory_space<vmem>>, vector<512x4xf32>,
    %c1_90 = arith.constant 1 : index
    %c2_91 = arith.constant 2 : index
    %c0_92 = arith.constant 0 : index
    %c0_93 = arith.constant 0 : index
    %64 = vector.load %arg7[%c1_90, %c2_91, %c0_92, %c0_93] : memref<10x10x10x4xf32, #tpu.memory_space<vmem>>, vector<8x8x8x4xf32>
    %65 = vector.shape_cast %64 : vector<8x8x8x4xf32> to vector<512x4xf32>
    %c0_94 = arith.constant 0 : index
    %c60 = arith.constant 60 : index
    %66 = vector.load %arg8[%c0_94, %c60] : memref<512x108xf32, #tpu.memory_space<vmem>>, vector<512x4xf32>
    tpu.vector_store %arg8[%c0_94, %c60], %65 {strides = array<i32>} : memref<512x108xf32, #tpu.memory_space<vmem>>, vector<512x4xf32>,
    %c1_95 = arith.constant 1 : index
    %c2_96 = arith.constant 2 : index
    %c1_97 = arith.constant 1 : index
    %c0_98 = arith.constant 0 : index
    %67 = vector.load %arg7[%c1_95, %c2_96, %c1_97, %c0_98] : memref<10x10x10x4xf32, #tpu.memory_space<vmem>>, vector<8x8x8x4xf32>
    %68 = vector.shape_cast %67 : vector<8x8x8x4xf32> to vector<512x4xf32>
    %c0_99 = arith.constant 0 : index
    %c64 = arith.constant 64 : index
    %69 = vector.load %arg8[%c0_99, %c64] : memref<512x108xf32, #tpu.memory_space<vmem>>, vector<512x4xf32>
    tpu.vector_store %arg8[%c0_99, %c64], %68 {strides = array<i32>} : memref<512x108xf32, #tpu.memory_space<vmem>>, vector<512x4xf32>,
    %c1_100 = arith.constant 1 : index
    %c2_101 = arith.constant 2 : index
    %c2_102 = arith.constant 2 : index
    %c0_103 = arith.constant 0 : index
    %70 = vector.load %arg7[%c1_100, %c2_101, %c2_102, %c0_103] : memref<10x10x10x4xf32, #tpu.memory_space<vmem>>, vector<8x8x8x4xf32>
    %71 = vector.shape_cast %70 : vector<8x8x8x4xf32> to vector<512x4xf32>
    %c0_104 = arith.constant 0 : index
    %c68 = arith.constant 68 : index
    %72 = vector.load %arg8[%c0_104, %c68] : memref<512x108xf32, #tpu.memory_space<vmem>>, vector<512x4xf32>
    tpu.vector_store %arg8[%c0_104, %c68], %71 {strides = array<i32>} : memref<512x108xf32, #tpu.memory_space<vmem>>, vector<512x4xf32>,
    %c2_105 = arith.constant 2 : index
    %c0_106 = arith.constant 0 : index
    %c0_107 = arith.constant 0 : index
    %c0_108 = arith.constant 0 : index
    %73 = vector.load %arg7[%c2_105, %c0_106, %c0_107, %c0_108] : memref<10x10x10x4xf32, #tpu.memory_space<vmem>>, vector<8x8x8x4xf32>
    %74 = vector.shape_cast %73 : vector<8x8x8x4xf32> to vector<512x4xf32>
    %c0_109 = arith.constant 0 : index
    %c72 = arith.constant 72 : index
    %75 = vector.load %arg8[%c0_109, %c72] : memref<512x108xf32, #tpu.memory_space<vmem>>, vector<512x4xf32>
    tpu.vector_store %arg8[%c0_109, %c72], %74 {strides = array<i32>} : memref<512x108xf32, #tpu.memory_space<vmem>>, vector<512x4xf32>,
    %c2_110 = arith.constant 2 : index
    %c0_111 = arith.constant 0 : index
    %c1_112 = arith.constant 1 : index
    %c0_113 = arith.constant 0 : index
    %76 = vector.load %arg7[%c2_110, %c0_111, %c1_112, %c0_113] : memref<10x10x10x4xf32, #tpu.memory_space<vmem>>, vector<8x8x8x4xf32>
    %77 = vector.shape_cast %76 : vector<8x8x8x4xf32> to vector<512x4xf32>
    %c0_114 = arith.constant 0 : index
    %c76 = arith.constant 76 : index
    %78 = vector.load %arg8[%c0_114, %c76] : memref<512x108xf32, #tpu.memory_space<vmem>>, vector<512x4xf32>
    tpu.vector_store %arg8[%c0_114, %c76], %77 {strides = array<i32>} : memref<512x108xf32, #tpu.memory_space<vmem>>, vector<512x4xf32>,
    %c2_115 = arith.constant 2 : index
    %c0_116 = arith.constant 0 : index
    %c2_117 = arith.constant 2 : index
    %c0_118 = arith.constant 0 : index
    %79 = vector.load %arg7[%c2_115, %c0_116, %c2_117, %c0_118] : memref<10x10x10x4xf32, #tpu.memory_space<vmem>>, vector<8x8x8x4xf32>
    %80 = vector.shape_cast %79 : vector<8x8x8x4xf32> to vector<512x4xf32>
    %c0_119 = arith.constant 0 : index
    %c80 = arith.constant 80 : index
    %81 = vector.load %arg8[%c0_119, %c80] : memref<512x108xf32, #tpu.memory_space<vmem>>, vector<512x4xf32>
    tpu.vector_store %arg8[%c0_119, %c80], %80 {strides = array<i32>} : memref<512x108xf32, #tpu.memory_space<vmem>>, vector<512x4xf32>,
    %c2_120 = arith.constant 2 : index
    %c1_121 = arith.constant 1 : index
    %c0_122 = arith.constant 0 : index
    %c0_123 = arith.constant 0 : index
    %82 = vector.load %arg7[%c2_120, %c1_121, %c0_122, %c0_123] : memref<10x10x10x4xf32, #tpu.memory_space<vmem>>, vector<8x8x8x4xf32>
    %83 = vector.shape_cast %82 : vector<8x8x8x4xf32> to vector<512x4xf32>
    %c0_124 = arith.constant 0 : index
    %c84 = arith.constant 84 : index
    %84 = vector.load %arg8[%c0_124, %c84] : memref<512x108xf32, #tpu.memory_space<vmem>>, vector<512x4xf32>
    tpu.vector_store %arg8[%c0_124, %c84], %83 {strides = array<i32>} : memref<512x108xf32, #tpu.memory_space<vmem>>, vector<512x4xf32>,
    %c2_125 = arith.constant 2 : index
    %c1_126 = arith.constant 1 : index
    %c1_127 = arith.constant 1 : index
    %c0_128 = arith.constant 0 : index
    %85 = vector.load %arg7[%c2_125, %c1_126, %c1_127, %c0_128] : memref<10x10x10x4xf32, #tpu.memory_space<vmem>>, vector<8x8x8x4xf32>
    %86 = vector.shape_cast %85 : vector<8x8x8x4xf32> to vector<512x4xf32>
    %c0_129 = arith.constant 0 : index
    %c88 = arith.constant 88 : index
    %87 = vector.load %arg8[%c0_129, %c88] : memref<512x108xf32, #tpu.memory_space<vmem>>, vector<512x4xf32>
    tpu.vector_store %arg8[%c0_129, %c88], %86 {strides = array<i32>} : memref<512x108xf32, #tpu.memory_space<vmem>>, vector<512x4xf32>,
    %c2_130 = arith.constant 2 : index
    %c1_131 = arith.constant 1 : index
    %c2_132 = arith.constant 2 : index
    %c0_133 = arith.constant 0 : index
    %88 = vector.load %arg7[%c2_130, %c1_131, %c2_132, %c0_133] : memref<10x10x10x4xf32, #tpu.memory_space<vmem>>, vector<8x8x8x4xf32>
    %89 = vector.shape_cast %88 : vector<8x8x8x4xf32> to vector<512x4xf32>
    %c0_134 = arith.constant 0 : index
    %c92 = arith.constant 92 : index
    %90 = vector.load %arg8[%c0_134, %c92] : memref<512x108xf32, #tpu.memory_space<vmem>>, vector<512x4xf32>
    tpu.vector_store %arg8[%c0_134, %c92], %89 {strides = array<i32>} : memref<512x108xf32, #tpu.memory_space<vmem>>, vector<512x4xf32>,
    %c2_135 = arith.constant 2 : index
    %c2_136 = arith.constant 2 : index
    %c0_137 = arith.constant 0 : index
    %c0_138 = arith.constant 0 : index
    %91 = vector.load %arg7[%c2_135, %c2_136, %c0_137, %c0_138] : memref<10x10x10x4xf32, #tpu.memory_space<vmem>>, vector<8x8x8x4xf32>
    %92 = vector.shape_cast %91 : vector<8x8x8x4xf32> to vector<512x4xf32>
    %c0_139 = arith.constant 0 : index
    %c96 = arith.constant 96 : index
    %93 = vector.load %arg8[%c0_139, %c96] : memref<512x108xf32, #tpu.memory_space<vmem>>, vector<512x4xf32>
    tpu.vector_store %arg8[%c0_139, %c96], %92 {strides = array<i32>} : memref<512x108xf32, #tpu.memory_space<vmem>>, vector<512x4xf32>,
    %c2_140 = arith.constant 2 : index
    %c2_141 = arith.constant 2 : index
    %c1_142 = arith.constant 1 : index
    %c0_143 = arith.constant 0 : index
    %94 = vector.load %arg7[%c2_140, %c2_141, %c1_142, %c0_143] : memref<10x10x10x4xf32, #tpu.memory_space<vmem>>, vector<8x8x8x4xf32>
    %95 = vector.shape_cast %94 : vector<8x8x8x4xf32> to vector<512x4xf32>
    %c0_144 = arith.constant 0 : index
    %c100 = arith.constant 100 : index
    %96 = vector.load %arg8[%c0_144, %c100] : memref<512x108xf32, #tpu.memory_space<vmem>>, vector<512x4xf32>
    tpu.vector_store %arg8[%c0_144, %c100], %95 {strides = array<i32>} : memref<512x108xf32, #tpu.memory_space<vmem>>, vector<512x4xf32>,
    %c2_145 = arith.constant 2 : index
    %c2_146 = arith.constant 2 : index
    %c2_147 = arith.constant 2 : index
    %c0_148 = arith.constant 0 : index
    %97 = vector.load %arg7[%c2_145, %c2_146, %c2_147, %c0_148] : memref<10x10x10x4xf32, #tpu.memory_space<vmem>>, vector<8x8x8x4xf32>
    %98 = vector.shape_cast %97 : vector<8x8x8x4xf32> to vector<512x4xf32>
    %c0_149 = arith.constant 0 : index
    %c104 = arith.constant 104 : index
    %99 = vector.load %arg8[%c0_149, %c104] : memref<512x108xf32, #tpu.memory_space<vmem>>, vector<512x4xf32>
    tpu.vector_store %arg8[%c0_149, %c104], %98 {strides = array<i32>} : memref<512x108xf32, #tpu.memory_space<vmem>>, vector<512x4xf32>,
    %c0_150 = arith.constant 0 : index
    %c0_151 = arith.constant 0 : index
    %100 = vector.load %arg8[%c0_150, %c0_151] : memref<512x108xf32, #tpu.memory_space<vmem>>, vector<512x108xf32>
    %c0_152 = arith.constant 0 : index
    %c0_153 = arith.constant 0 : index
    %101 = vector.load %arg4[%c0_152, %c0_153] : memref<108x8xf32, #tpu.memory_space<vmem>>, vector<108x8xf32>
    %cst_154 = arith.constant dense<0.000000e+00> : vector<512x8xf32>
    %102 = tpu.matmul %100, %101, %cst_154 {dimension_numbers = #tpu.dot_dimension_numbers<[1], [0], [0], [1], [0, 0, 1, 1], [], []>} : vector<512x108xf32>, vector<108x8xf32>, vector<512x8xf32> -> vector<512x8xf32>
    %cst_155 = arith.constant dense<0.000000e+00> : vector<8xf32>
    %103 = vector.multi_reduction <add>, %102, %cst_155 [0] : vector<512x8xf32> to vector<8xf32>
    %104 = vector.shape_cast %103 : vector<8xf32> to vector<1x8xf32>
    %c0_156 = arith.constant 0 : index
    %c0_157 = arith.constant 0 : index
    %c0_158 = arith.constant 0 : index
    %105 = vector.load %arg6[%c0_156, %c0_157, %c0_158] : memref<1x2x8xf32, #tpu.memory_space<vmem>>, vector<1x1x8xf32>
    %106 = vector.shape_cast %105 : vector<1x1x8xf32> to vector<1x8xf32>
    %107 = vector.shape_cast %104 : vector<1x8xf32> to vector<1x1x8xf32>
    tpu.vector_store %arg6[%c0_156, %c0_157, %c0_158], %107 {strides = array<i32>} : memref<1x2x8xf32, #tpu.memory_space<vmem>>, vector<1x1x8xf32>,
    %108 = arith.mulf %102, %102 : vector<512x8xf32>
    %cst_159 = arith.constant dense<0.000000e+00> : vector<8xf32>
    %109 = vector.multi_reduction <add>, %108, %cst_159 [0] : vector<512x8xf32> to vector<8xf32>
    %110 = vector.shape_cast %109 : vector<8xf32> to vector<1x8xf32>
    %c0_160 = arith.constant 0 : index
    %c1_161 = arith.constant 1 : index
    %c0_162 = arith.constant 0 : index
    %111 = vector.load %arg6[%c0_160, %c1_161, %c0_162] : memref<1x2x8xf32, #tpu.memory_space<vmem>>, vector<1x1x8xf32>
    %112 = vector.shape_cast %111 : vector<1x1x8xf32> to vector<1x8xf32>
    %113 = vector.shape_cast %110 : vector<1x8xf32> to vector<1x1x8xf32>
    tpu.vector_store %arg6[%c0_160, %c1_161, %c0_162], %113 {strides = array<i32>} : memref<1x2x8xf32, #tpu.memory_space<vmem>>, vector<1x1x8xf32>,
    %c0_163 = arith.constant 0 : index
    %c0_164 = arith.constant 0 : index
    %c0_165 = arith.constant 0 : index
    %114 = vector.load %arg5[%c0_163, %c0_164, %c0_165] : memref<1x512x8xf32, #tpu.memory_space<vmem>>, vector<1x512x8xf32>
    %115 = vector.shape_cast %114 : vector<1x512x8xf32> to vector<512x8xf32>
    %116 = vector.shape_cast %102 : vector<512x8xf32> to vector<1x512x8xf32>
    tpu.vector_store %arg5[%c0_163, %c0_164, %c0_165], %116 {strides = array<i32>} : memref<1x512x8xf32, #tpu.memory_space<vmem>>, vector<1x512x8xf32>,
    return
  }
  func.func @transform_0(%arg0: i32) -> (i32, i32, i32) {
    %c0_i32 = arith.constant 0 : i32
    %c0_i32_0 = arith.constant 0 : i32
    %c0_i32_1 = arith.constant 0 : i32
    return %arg0, %c0_i32, %c0_i32_0 : i32, i32, i32
  }
  func.func @transform_1(%arg0: i32) -> (i32, i32) {
    %c0_i32 = arith.constant 0 : i32
    %c0_i32_0 = arith.constant 0 : i32
    %c0_i32_1 = arith.constant 0 : i32
    return %c0_i32, %c0_i32_0 : i32, i32
  }
  func.func @transform_2(%arg0: i32) -> (i32, i32) {
    %c0_i32 = arith.constant 0 : i32
    %c0_i32_0 = arith.constant 0 : i32
    %c0_i32_1 = arith.constant 0 : i32
    return %c0_i32, %c0_i32_0 : i32, i32
  }
  func.func @transform_3(%arg0: i32) -> (i32, i32) {
    %c0_i32 = arith.constant 0 : i32
    %c0_i32_0 = arith.constant 0 : i32
    %c0_i32_1 = arith.constant 0 : i32
    return %c0_i32, %c0_i32_0 : i32, i32
  }
  func.func @transform_4(%arg0: i32) -> (i32, i32, i32) {
    %c0_i32 = arith.constant 0 : i32
    %c0_i32_0 = arith.constant 0 : i32
    %c0_i32_1 = arith.constant 0 : i32
    return %arg0, %c0_i32, %c0_i32_0 : i32, i32, i32
  }
  func.func @transform_5(%arg0: i32) -> (i32, i32, i32) {
    %c0_i32 = arith.constant 0 : i32
    %c0_i32_0 = arith.constant 0 : i32
    %c0_i32_1 = arith.constant 0 : i32
    return %arg0, %c0_i32, %c0_i32_0 : i32, i32, i32
  }
}

module attributes {stable_mosaic.version = 11 : i64} {
  func.func @_bn_act_kernel(%arg0: i32, %arg1: memref<1x8x512xf32, #tpu.memory_space<vmem>>, %arg2: memref<1x512xf32, #tpu.memory_space<vmem>>, %arg3: memref<1x512xf32, #tpu.memory_space<vmem>>, %arg4: memref<1x8x512xf32, #tpu.memory_space<vmem>>) attributes {dimension_semantics = [#tpu.dimension_semantics<parallel>], iteration_bounds = array<i64: 2>, scalar_prefetch = 0 : i64, scratch_operands = 0 : i64, tpu.core_type = #tpu.core_type<tc>, window_params = [{transform_indices = @transform_0, window_bounds = array<i64: 1, 8, 512>}, {pipeline_mode = #tpu.pipeline_mode<synchronous>, transform_indices = @transform_1, window_bounds = array<i64: 1, 512>}, {pipeline_mode = #tpu.pipeline_mode<synchronous>, transform_indices = @transform_2, window_bounds = array<i64: 1, 512>}, {transform_indices = @transform_3, window_bounds = array<i64: 1, 8, 512>}]} {
    %c0 = arith.constant 0 : index
    %c0_0 = arith.constant 0 : index
    %c0_1 = arith.constant 0 : index
    %0 = vector.load %arg1[%c0, %c0_0, %c0_1] : memref<1x8x512xf32, #tpu.memory_space<vmem>>, vector<1x8x512xf32>
    %c0_2 = arith.constant 0 : index
    %c0_3 = arith.constant 0 : index
    %1 = vector.load %arg2[%c0_2, %c0_3] : memref<1x512xf32, #tpu.memory_space<vmem>>, vector<1x512xf32>
    %2 = vector.shape_cast %1 : vector<1x512xf32> to vector<1x1x512xf32>
    %3 = vector.broadcast %2 : vector<1x1x512xf32> to vector<1x8x512xf32>
    %4 = arith.mulf %0, %3 : vector<1x8x512xf32>
    %c0_4 = arith.constant 0 : index
    %c0_5 = arith.constant 0 : index
    %5 = vector.load %arg3[%c0_4, %c0_5] : memref<1x512xf32, #tpu.memory_space<vmem>>, vector<1x512xf32>
    %6 = vector.shape_cast %5 : vector<1x512xf32> to vector<1x1x512xf32>
    %7 = vector.broadcast %6 : vector<1x1x512xf32> to vector<1x8x512xf32>
    %8 = arith.addf %4, %7 : vector<1x8x512xf32>
    %cst = arith.constant 0.000000e+00 : f32
    %9 = vector.broadcast %cst : f32 to vector<1x8x512xf32>
    %10 = arith.cmpf ogt, %8, %9 : vector<1x8x512xf32>
    %cst_6 = arith.constant 2.000000e-01 : f32
    %11 = vector.broadcast %cst_6 : f32 to vector<1x8x512xf32>
    %12 = arith.mulf %11, %8 : vector<1x8x512xf32>
    %13 = arith.select %10, %8, %12 : vector<1x8x512xi1>, vector<1x8x512xf32>
    %c0_7 = arith.constant 0 : index
    %c0_8 = arith.constant 0 : index
    %c0_9 = arith.constant 0 : index
    %14 = vector.load %arg4[%c0_7, %c0_8, %c0_9] : memref<1x8x512xf32, #tpu.memory_space<vmem>>, vector<1x8x512xf32>
    tpu.vector_store %arg4[%c0_7, %c0_8, %c0_9], %13 {strides = array<i32>} : memref<1x8x512xf32, #tpu.memory_space<vmem>>, vector<1x8x512xf32>,
    return
  }
  func.func @transform_0(%arg0: i32) -> (i32, i32, i32) {
    %c0_i32 = arith.constant 0 : i32
    %c0_i32_0 = arith.constant 0 : i32
    %c0_i32_1 = arith.constant 0 : i32
    return %arg0, %c0_i32, %c0_i32_0 : i32, i32, i32
  }
  func.func @transform_1(%arg0: i32) -> (i32, i32) {
    %c0_i32 = arith.constant 0 : i32
    %c0_i32_0 = arith.constant 0 : i32
    %c0_i32_1 = arith.constant 0 : i32
    return %c0_i32, %c0_i32_0 : i32, i32
  }
  func.func @transform_2(%arg0: i32) -> (i32, i32) {
    %c0_i32 = arith.constant 0 : i32
    %c0_i32_0 = arith.constant 0 : i32
    %c0_i32_1 = arith.constant 0 : i32
    return %c0_i32, %c0_i32_0 : i32, i32
  }
  func.func @transform_3(%arg0: i32) -> (i32, i32, i32) {
    %c0_i32 = arith.constant 0 : i32
    %c0_i32_0 = arith.constant 0 : i32
    %c0_i32_1 = arith.constant 0 : i32
    return %arg0, %c0_i32, %c0_i32_0 : i32, i32, i32
  }
}

</mosaic_0001>

<llo_original>
// kernel: tile.13
$region0: #{tile.13}
  #allocation0 [shape = 's32[1]{0}', space=sflag, size = 0x4, scoped, tag = 'scoped memory for tile.13']
  %s0 = inlined_call_operand.vmem [shape: f32[8], index: 0, kind: input, shape index: {}]
  %s1 = inlined_call_operand.vmem [shape: f32[64,8], index: 1, kind: output, shape index: {}]
  // Predicated region
  $region2: #{tile.13} parent=0 // pred_check
    _
  $region3: #{tile.13} parent=0 // pred_check_branch
    %3 = sbr.rel (0) target = $region5
  $region4: #{tile.13} parent=0 // pred_region
    _
  $region5: #{tile.13} parent=0 // pred_fallthru
    _
  %v4 = vld [vmem:[%s0] ss:$0 sm:$0xff]
  %5 = vst [vmem:[%s1] sm:$0xff] %v4
  %s6 = scalar_lea.vmem %s1, 8
  %7 = vst [vmem:[%s6] sm:$0xff] %v4
  %s8 = scalar_lea.vmem %s1, 16
  %9 = vst [vmem:[%s8] sm:$0xff] %v4
  %s10 = scalar_lea.vmem %s1, 24
  %11 = vst [vmem:[%s10] sm:$0xff] %v4
  %s12 = scalar_lea.vmem %s1, 32
  %13 = vst [vmem:[%s12] sm:$0xff] %v4
  %s14 = scalar_lea.vmem %s1, 40
  %15 = vst [vmem:[%s14] sm:$0xff] %v4
  %s16 = scalar_lea.vmem %s1, 48
  %17 = vst [vmem:[%s16] sm:$0xff] %v4
  %s18 = scalar_lea.vmem %s1, 56
  %19 = vst [vmem:[%s18] sm:$0xff] %v4

// kernel: tile.14
$region0: #{tile.14}
  %s0 = inlined_call_operand.vmem [shape: f32[64,8], index: 0, kind: input, shape index: {}]
  %s1 = inlined_call_operand.vmem [shape: f32[1,512], index: 1, kind: output, shape index: {}]
  $region1: #{tile.14} parent=0
    #allocation0 [shape = 'u8[16384]{0}', space=vmem, size = 0x4000, scoped, tag = 'scoped mem for output reshape']
    %s2 = smov 3
    %v3 = vld [vmem:[%s0] ss:$16 sm:%s2]
    %s4 = smov 12
    %v5 = vld [vmem:[%s0] ss:$16 sm:%s4]
    %vm6 = vcmask 1043458
    %v7 = vsel %vm6, %v5, %v3
    %vm8 = vcmask 64512
    %9 = vst.msk [vmem:[#allocation0] ss:$8 sm:$0xf] %vm8, %v7
    %s10 = scalar_lea.vmem %s0, 15
    %s11 = smov 3
    %v12 = vld [vmem:[%s10] ss:$16 sm:%s11]
    %s13 = scalar_lea.vmem %s0, 15
    %s14 = smov 12
    %v15 = vld [vmem:[%s13] ss:$16 sm:%s14]
    %vm16 = vcmask 1043458
    %v17 = vsel %vm16, %v15, %v12
    %18 = vrot.lane.b32.xlu0 %v17, 120
    %v19 = vpop.permute.xlu0 %18
    %vm20 = vcmask 1048512
    %21 = vst.msk [vmem:[#allocation0] ss:$8 sm:$0xf] %vm20, %v19
    %s22 = scalar_lea.vmem %s0, 14
    %s23 = smov 3
    %v24 = vld [vmem:[%s22] ss:$16 sm:%s23]
    %s25 = scalar_lea.vmem %s0, 14
    %s26 = smov 12
    %v27 = vld [vmem:[%s25] ss:$16 sm:%s26]
    %vm28 = vcmask 1043458
    %v29 = vsel %vm28, %v27, %v24
    %30 = vrot.lane.b32.xlu0 %v29, 112
    %v31 = vpop.permute.xlu0 %30
    %vm32 = vcmask 982912
    %33 = vst.msk [vmem:[#allocation0] ss:$8 sm:$0xf] %vm32, %v31
    %s34 = scalar_lea.vmem %s0, 13
    %s35 = smov 3
    %v36 = vld [vmem:[%s34] ss:$16 sm:%s35]
    %s37 = scalar_lea.vmem %s0, 13
    %s38 = smov 12
    %v39 = vld [vmem:[%s37] ss:$16 sm:%s38]
    %vm40 = vcmask 1043458
    %v41 = vsel %vm40, %v39, %v36
    %42 = vrot.lane.b32.xlu0 %v41, 104
    %v43 = vpop.permute.xlu0 %42
    %vm44 = vcmask 917312
    %45 = vst.msk [vmem:[#allocation0] ss:$8 sm:$0xf] %vm44, %v43
    %s46 = scalar_lea.vmem %s0, 12
    %s47 = smov 3
    %v48 = vld [vmem:[%s46] ss:$16 sm:%s47]
    %s49 = scalar_lea.vmem %s0, 12
    %s50 = smov 12
    %v51 = vld [vmem:[%s49] ss:$16 sm:%s50]
    %vm52 = vcmask 1043458
    %v53 = vsel %vm52, %v51, %v48
    %54 = vrot.lane.b32.xlu0 %v53, 96
    %v55 = vpop.permute.xlu0 %54
    %vm56 = vcmask 851712
    %57 = vst.msk [vmem:[#allocation0] ss:$8 sm:$0xf] %vm56, %v55
    %s58 = scalar_lea.vmem %s0, 11
    %s59 = smov 3
    %v60 = vld [vmem:[%s58] ss:$16 sm:%s59]
    %s61 = scalar_lea.vmem %s0, 11
    %s62 = smov 12
    %v63 = vld [vmem:[%s61] ss:$16 sm:%s62]
    %vm64 = vcmask 1043458
    %v65 = vsel %vm64, %v63, %v60
    %66 = vrot.lane.b32.xlu0 %v65, 88
    %v67 = vpop.permute.xlu0 %66
    %vm68 = vcmask 786112
    %69 = vst.msk [vmem:[#allocation0] ss:$8 sm:$0xf] %vm68, %v67
    %s70 = scalar_lea.vmem %s0, 10
    %s71 = smov 3
    %v72 = vld [vmem:[%s70] ss:$16 sm:%s71]
    %s73 = scalar_lea.vmem %s0, 10
    %s74 = smov 12
    %v75 = vld [vmem:[%s73] ss:$16 sm:%s74]
    %vm76 = vcmask 1043458
    %v77 = vsel %vm76, %v75, %v72
    %78 = vrot.lane.b32.xlu0 %v77, 80
    %v79 = vpop.permute.xlu0 %78
    %vm80 = vcmask 720512
    %81 = vst.msk [vmem:[#allocation0] ss:$8 sm:$0xf] %vm80, %v79
    %s82 = scalar_lea.vmem %s0, 9
    %s83 = smov 3
    %v84 = vld [vmem:[%s82] ss:$16 sm:%s83]
    %s85 = scalar_lea.vmem %s0, 9
    %s86 = smov 12
    %v87 = vld [vmem:[%s85] ss:$16 sm:%s86]
    %vm88 = vcmask 1043458
    %v89 = vsel %vm88, %v87, %v84
    %90 = vrot.lane.b32.xlu0 %v89, 72
    %v91 = vpop.permute.xlu0 %90
    %vm92 = vcmask 654912
    %93 = vst.msk [vmem:[#allocation0] ss:$8 sm:$0xf] %vm92, %v91
    %s94 = scalar_lea.vmem %s0, 8
    %s95 = smov 3
    %v96 = vld [vmem:[%s94] ss:$16 sm:%s95]
    %s97 = scalar_lea.vmem %s0, 8
    %s98 = smov 12
    %v99 = vld [vmem:[%s97] ss:$16 sm:%s98]
    %vm100 = vcmask 1043458
    %v101 = vsel %vm100, %v99, %v96
    %102 = vrot.lane.b32.xlu0 %v101, 64
    %v103 = vpop.permute.xlu0 %102
    %vm104 = vcmask 589312
    %105 = vst.msk [vmem:[#allocation0] ss:$8 sm:$0xf] %vm104, %v103
    %s106 = scalar_lea.vmem %s0, 7
    %s107 = smov 3
    %v108 = vld [vmem:[%s106] ss:$16 sm:%s107]
    %s109 = scalar_lea.vmem %s0, 7
    %s110 = smov 12
    %v111 = vld [vmem:[%s109] ss:$16 sm:%s110]
    %vm112 = vcmask 1043458
    %v113 = vsel %vm112, %v111, %v108
    %114 = vrot.lane.b32.xlu0 %v113, 56
    %v115 = vpop.permute.xlu0 %114
    %vm116 = vcmask 523712
    %117 = vst.msk [vmem:[#allocation0] ss:$8 sm:$0xf] %vm116, %v115
    %s118 = scalar_lea.vmem %s0, 6
    %s119 = smov 3
    %v120 = vld [vmem:[%s118] ss:$16 sm:%s119]
    %s121 = scalar_lea.vmem %s0, 6
    %s122 = smov 12
    %v123 = vld [vmem:[%s121] ss:$16 sm:%s122]
    %vm124 = vcmask 1043458
    %v125 = vsel %vm124, %v123, %v120
    %126 = vrot.lane.b32.xlu0 %v125, 48
    %v127 = vpop.permute.xlu0 %126
    %vm128 = vcmask 458112
    %129 = vst.msk [vmem:[#allocation0] ss:$8 sm:$0xf] %vm128, %v127
    %s130 = scalar_lea.vmem %s0, 5
    %s131 = smov 3
    %v132 = vld [vmem:[%s130] ss:$16 sm:%s131]
    %s133 = scalar_lea.vmem %s0, 5
    %s134 = smov 12
    %v135 = vld [vmem:[%s133] ss:$16 sm:%s134]
    %vm136 = vcmask 1043458
    %v137 = vsel %vm136, %v135, %v132
    %138 = vrot.lane.b32.xlu0 %v137, 40
    %v139 = vpop.permute.xlu0 %138
    %vm140 = vcmask 392512
    %141 = vst.msk [vmem:[#allocation0] ss:$8 sm:$0xf] %vm140, %v139
    %s142 = scalar_lea.vmem %s0, 4
    %s143 = smov 3
    %v144 = vld [vmem:[%s142] ss:$16 sm:%s143]
    %s145 = scalar_lea.vmem %s0, 4
    %s146 = smov 12
    %v147 = vld [vmem:[%s145] ss:$16 sm:%s146]
    %vm148 = vcmask 1043458
    %v149 = vsel %vm148, %v147, %v144
    %150 = vrot.lane.b32.xlu0 %v149, 32
    %v151 = vpop.permute.xlu0 %150
    %vm152 = vcmask 326912
    %153 = vst.msk [vmem:[#allocation0] ss:$8 sm:$0xf] %vm152, %v151
    %s154 = scalar_lea.vmem %s0, 3
    %s155 = smov 3
    %v156 = vld [vmem:[%s154] ss:$16 sm:%s155]
    %s157 = scalar_lea.vmem %s0, 3
    %s158 = smov 12
    %v159 = vld [vmem:[%s157] ss:$16 sm:%s158]
    %vm160 = vcmask 1043458
    %v161 = vsel %vm160, %v159, %v156
    %162 = vrot.lane.b32.xlu0 %v161, 24
    %v163 = vpop.permute.xlu0 %162
    %vm164 = vcmask 261312
    %165 = vst.msk [vmem:[#allocation0] ss:$8 sm:$0xf] %vm164, %v163
    %s166 = scalar_lea.vmem %s0, 2
    %s167 = smov 3
    %v168 = vld [vmem:[%s166] ss:$16 sm:%s167]
    %s169 = scalar_lea.vmem %s0, 2
    %s170 = smov 12
    %v171 = vld [vmem:[%s169] ss:$16 sm:%s170]
    %vm172 = vcmask 1043458
    %v173 = vsel %vm172, %v171, %v168
    %174 = vrot.lane.b32.xlu0 %v173, 16
    %v175 = vpop.permute.xlu0 %174
    %vm176 = vcmask 195712
    %177 = vst.msk [vmem:[#allocation0] ss:$8 sm:$0xf] %vm176, %v175
    %s178 = scalar_lea.vmem %s0, 1
    %s179 = smov 3
    %v180 = vld [vmem:[%s178] ss:$16 sm:%s179]
    %s181 = scalar_lea.vmem %s0, 1
    %s182 = smov 12
    %v183 = vld [vmem:[%s181] ss:$16 sm:%s182]
    %vm184 = vcmask 1043458
    %v185 = vsel %vm184, %v183, %v180
    %186 = vrot.lane.b32.xlu0 %v185, 8
    %v187 = vpop.permute.xlu0 %186
    %vm188 = vcmask 130112
    %189 = vst.msk [vmem:[#allocation0] ss:$8 sm:$0xf] %vm188, %v187
    %s191 = sshllo.u32 0, 1
    %v193 = vld [vmem:[#allocation0] sm:%s191]
    %s194 = sshllo.u32 0, 1
    %195 = vst [vmem:[%s1] sm:%s194] %v193
    %s196 = scalar_lea.vmem [#allocation0], 8
    %v197 = vld [vmem:[%s196] sm:%s191]
    %s198 = sshllo.u32 0, 1
    %s199 = scalar_lea.vmem %s1, 1
    %200 = vst [vmem:[%s199] sm:%s198] %v197
    %s201 = scalar_lea.vmem [#allocation0], 16
    %v202 = vld [vmem:[%s201] sm:%s191]
    %s203 = sshllo.u32 0, 1
    %s204 = smul.addr 1, 2
    %s205 = scalar_lea.vmem %s1, %s204
    %206 = vst [vmem:[%s205] sm:%s203] %v202
    %s207 = scalar_lea.vmem [#allocation0], 24
    %v208 = vld [vmem:[%s207] sm:%s191]
    %s209 = sshllo.u32 0, 1
    %s210 = smul.addr 1, 3
    %s211 = scalar_lea.vmem %s1, %s210
    %212 = vst [vmem:[%s211] sm:%s209] %v208

</llo_original>
